<compile_context>
chip_gen: v6e
topology: v6e:2x2x1
jax: 0.10.0
libtpu: 0.0.40
codegen_flags: <defaults>
</compile_context>

<pallas_src>
import functools

import jax
import jax.numpy as jnp
from jax.experimental import pallas as pl
from jax.experimental.pallas import tpu as pltpu


# --------------------------------------------------------------------------------------
# Kernel
# --------------------------------------------------------------------------------------
def _time_att_kernel(x_ref, wqkv_ref, bqkv_ref, gamma_ref, beta_ref, o_ref,
                     *, eps, d_real, kv_tile, mxu_dtype, approx_recip):
    bblk, T, Dp = x_ref.shape
    x_raw = x_ref[...]                                   # (b_blk, T, Dp), input dtype

    # ---- fused QKV projection: one (b_blk*T, Dp) x (Dp, 3*Dp) MXU matmul ------------
    x2d = x_raw.astype(mxu_dtype).reshape(bblk * T, Dp)
    qkv = jnp.dot(x2d, wqkv_ref[...],
                  preferred_element_type=jnp.float32) + bqkv_ref[...]
    qkv = qkv.reshape(bblk, T, 3 * Dp)
    # 1/sqrt(T/num_head) is pre-folded into Wq/bq; sum(W1) and b1 into Wv/bv.
    q = qkv[:, :, 0 * Dp:1 * Dp].astype(mxu_dtype)
    k = qkv[:, :, 1 * Dp:2 * Dp].astype(mxu_dtype)
    v = qkv[:, :, 2 * Dp:3 * Dp].astype(mxu_dtype)

    # ---- attention: key-tiled online softmax, normalization deferred to the end -----
    # kv_tile == T -> single dense tile (only the j == 0 branch is emitted).
    n_kv = T // kv_tile
    m_i = l_i = acc = None
    for j in range(n_kv):                                # static unroll (LLO-visible)
        k_j = k[:, j * kv_tile:(j + 1) * kv_tile, :]
        v_j = v[:, j * kv_tile:(j + 1) * kv_tile, :]
        s = jnp.einsum('btd,bsd->bts', q, k_j,
                       preferred_element_type=jnp.float32)   # (b_blk, T, kv_tile) f32
        m_blk = jnp.max(s, axis=-1, keepdims=True)
        if j == 0:
            m_new = m_blk
            p = jnp.exp(s - m_new)
            l_i = jnp.sum(p, axis=-1, keepdims=True)
            acc = jnp.einsum('bts,bsd->btd', p.astype(mxu_dtype), v_j,
                             preferred_element_type=jnp.float32)
        else:
            m_new = jnp.maximum(m_i, m_blk)
            alpha = jnp.exp(m_i - m_new)
            p = jnp.exp(s - m_new)
            l_i = alpha * l_i + jnp.sum(p, axis=-1, keepdims=True)
            acc = alpha * acc + jnp.einsum('bts,bsd->btd', p.astype(mxu_dtype), v_j,
                                           preferred_element_type=jnp.float32)
        m_i = m_new

    # Deferred softmax normalization: one (b_blk, T, Dp) scale instead of (b_blk, T, T).
    # Wv/bv already carry sum(W1) and b1, so `line` == attn * sum(W1) + b1 exactly.
    line = acc * pl.reciprocal(l_i, approx=approx_recip)

    # ---- residual + LayerNorm over the true feature dim -----------------------------
    y = x_raw.astype(jnp.float32) + line                 # padded lanes of y are exactly 0
    inv_d = 1.0 / jnp.float32(d_real)
    mean = jnp.sum(y, axis=-1, keepdims=True) * inv_d
    diff = y - mean
    ssq = jnp.sum(diff * diff, axis=-1, keepdims=True)
    if Dp != d_real:
        # Each zero padded lane contributed exactly mean^2 to ssq; remove it so the
        # centered (PyTorch-parity) variance is exact over the true D lanes.
        ssq = ssq - jnp.float32(Dp - d_real) * (mean * mean)
    var = ssq * inv_d
    y_hat = diff * jax.lax.rsqrt(var + eps)
    # gamma/beta are zero on padded lanes -> padded output lanes are 0 (sliced outside).
    o_ref[...] = (y_hat * gamma_ref[...] + beta_ref[...]).astype(o_ref.dtype)


# --------------------------------------------------------------------------------------
# Wrapper helpers
# --------------------------------------------------------------------------------------
def _round_up(n, m):
    return ((n + m - 1) // m) * m


def _pad_last(a, dp):
    pad = dp - a.shape[-1]
    if pad == 0:
        return a
    cfg = [(0, 0)] * (a.ndim - 1) + [(0, pad)]
    return jnp.pad(a, cfg)


def _pad_2d(a, rows, cols):
    return jnp.pad(a, ((0, rows - a.shape[0]), (0, cols - a.shape[1])))


def _vmem_capacity_bytes():
    try:
        info = pltpu.get_tpu_info()
        return int(getattr(info, "vmem_capacity_bytes", 64 * 1024 * 1024))
    except Exception:
        return 64 * 1024 * 1024        # conservative default: v7x per-TensorCore VMEM


def _pick_kv_tile(T, requested):
    if requested is not None and requested > 0 and T % requested == 0:
        return int(requested)
    if T <= 1024:
        return T                       # dense path: score tile stays modest
    for tk in (1024, 512, 256):
        if T % tk == 0:
            return tk
    # TODO(synk): mask ragged key tiles for very long T not divisible by a power-of-two.
    return T


def _footprint_bytes(b, T, Dp, Tk, in_item, out_item, mxu_item):
    # Rough per-grid-step live VMEM: f32 intermediates (qkv/acc/y/diff/...), mxu-dtype
    # q/k/v, f32 score tile, plus double-buffered x/out IO tiles.
    act = b * T * (4 * (6 * Dp + Tk) + 3 * mxu_item * Dp)
    io = 2 * b * T * Dp * (in_item + out_item)
    return act + io


def _pick_b_blk(B, T, Dp, Tk, in_item, out_item, mxu_item, budget, max_rows,
                prefer_multi_step):
    candidates = [1]
    for b in range(2, B + 1):
        if b * T > max_rows:
            break
        if _footprint_bytes(b, T, Dp, Tk, in_item, out_item, mxu_item) > budget:
            break
        candidates.append(b)
    # Fewest grid steps first (amortizes ~0.35 us/step + weight residency), then least
    # padded-batch waste.  Handles non-divisor B without collapsing to b_blk = 1.
    best = min(candidates, key=lambda b: (pl.cdiv(B, b), pl.cdiv(B, b) * b))
    # v7x megacore: keep >= 2 grid steps so both TensorCores get work under
    # dimension_semantics=("parallel",). v5e/v6e are single-TC -> never split.
    if prefer_multi_step and B >= 2 and pl.cdiv(B, best) < 2:
        best = pl.cdiv(B, 2)
    return max(1, best)


# --------------------------------------------------------------------------------------
# Forward wrapper
# --------------------------------------------------------------------------------------
def time_att_forward(x, params, *, num_head, eps=1e-5, mxu_dtype=jnp.bfloat16,
                     kv_tile=None, b_blk=None):
    """x: (B, T, D). params: dict of weights in PyTorch layouts."""
    B, T, D = x.shape
    Dp = _round_up(D, 128)                         # lane-dense feature dim
    mxu_item = jnp.dtype(mxu_dtype).itemsize
    out_dtype = x.dtype
    out_item = jnp.dtype(out_dtype).itemsize
    pad_feat = (Dp != D)
    in_item = mxu_item if pad_feat else jnp.dtype(x.dtype).itemsize

    Tk = _pick_kv_tile(T, kv_tile)

    # ---- generation-aware budgets ----------------------------------------------------
    vmem_cap = _vmem_capacity_bytes()
    if vmem_cap >= 100 * 1024 * 1024:              # v5e / v6e: 128 MiB VMEM, single TC
        budget, limit_cap, max_rows, prefer_multi_step = (
            48 * 1024 * 1024, 96 * 1024 * 1024, 1024, False)
    else:                                          # v7x-like: 64 MiB per TC, 2 TCs
        budget, limit_cap, max_rows, prefer_multi_step = (
            26 * 1024 * 1024, 52 * 1024 * 1024, 512, True)

    if b_blk is None:
        b_blk = _pick_b_blk(B, T, Dp, Tk, in_item, out_item, mxu_item,
                            budget, max_rows, prefer_multi_step)
    b_blk = max(1, min(int(b_blk), B))
    n_steps = pl.cdiv(B, b_blk)
    B_pad = n_steps * b_blk

    # ---- weight prep (wrapper-side, one-time) ----------------------------------------
    w1sum = jnp.sum(params["w1"]).astype(jnp.float32)     # Linear(num_head -> 1) collapse
    b1 = params["b1"].reshape(()).astype(jnp.float32)
    # k is transposed BEFORE .shape[-1] is read in the PyTorch module -> kd = sqrt(T/H).
    kd_inv = 1.0 / jnp.sqrt(jnp.float32(T) / jnp.float32(num_head))

    wq = params["wq"].T.astype(jnp.float32) * kd_inv      # fold score scale into Wq/bq
    wk = params["wk"].T.astype(jnp.float32)
    wv = params["wv"].T.astype(jnp.float32) * w1sum       # fold sum(W1) into Wv
    bq = params["bq"].astype(jnp.float32) * kd_inv
    bk = params["bk"].astype(jnp.float32)
    bv = params["bv"].astype(jnp.float32) * w1sum + b1    # softmax rows sum to 1 -> fold b1

    wqkv = jnp.concatenate([_pad_2d(wq, Dp, Dp), _pad_2d(wk, Dp, Dp),
                            _pad_2d(wv, Dp, Dp)], axis=1).astype(mxu_dtype)   # (Dp, 3Dp)
    bqkv = jnp.concatenate([_pad_last(bq.reshape(1, D), Dp),
                            _pad_last(bk.reshape(1, D), Dp),
                            _pad_last(bv.reshape(1, D), Dp)], axis=1)          # (1, 3Dp) f32
    gamma_p = _pad_last(params["ln_w"].reshape(1, D).astype(jnp.float32), Dp)
    beta_p = _pad_last(params["ln_b"].reshape(1, D).astype(jnp.float32), Dp)

    # ---- activation prep ---------------------------------------------------------------
    if pad_feat:
        x_in = _pad_last(x, Dp).astype(mxu_dtype)
    else:
        # D is already lane-aligned: skip the wrapper pad/cast HBM round-trip and cast
        # to the MXU dtype inside the kernel instead.
        x_in = x
    if B_pad != B:
        x_in = jnp.pad(x_in, ((0, B_pad - B), (0, 0), (0, 0)))

    # ---- compiler params / cost --------------------------------------------------------
    wbytes = 2 * (3 * Dp * Dp * mxu_item + 5 * Dp * 4)
    vmem_est = wbytes + _footprint_bytes(b_blk, T, Dp, Tk, in_item, out_item, mxu_item)
    vmem_limit = int(min(limit_cap, max(32 * 1024 * 1024, 2 * vmem_est)))

    cost = pl.CostEstimate(
        flops=int(2 * B_pad * T * Dp * 3 * Dp + 4 * B_pad * T * T * Dp
                  + 16 * B_pad * T * Dp),
        transcendentals=int(B_pad * T * (T + 2)),
        bytes_accessed=int(B_pad * T * Dp * (in_item + out_item)
                           + 3 * Dp * Dp * mxu_item + 5 * Dp * 4),
    )

    kernel = functools.partial(
        _time_att_kernel, eps=float(eps), d_real=D, kv_tile=Tk, mxu_dtype=mxu_dtype,
        approx_recip=bool(jnp.dtype(mxu_dtype) != jnp.dtype(jnp.float32)))

    def _const_spec(shape, single):
        idx = lambda i: (0,) * len(shape)
        if single:
            # Weights/biases never change across the grid -> single-buffer them.
            return pl.BlockSpec(shape, idx, pipeline_mode=pl.Buffered(1))
        return pl.BlockSpec(shape, idx)

    def _run(single_buffer_weights):
        return pl.pallas_call(
            kernel,
            out_shape=jax.ShapeDtypeStruct((B_pad, T, Dp), out_dtype),
            grid=(n_steps,),
            in_specs=[
                pl.BlockSpec((b_blk, T, Dp), lambda i: (i, 0, 0)),       # x
                _const_spec((Dp, 3 * Dp), single_buffer_weights),        # [Wq*kd|Wk|Wv*w1]
                _const_spec((1, 3 * Dp), single_buffer_weights),         # fused bias
                _const_spec((1, Dp), single_buffer_weights),             # gamma
                _const_spec((1, Dp), single_buffer_weights),             # beta
            ],
            out_specs=pl.BlockSpec((b_blk, T, Dp), lambda i: (i, 0, 0)),
            compiler_params=pltpu.CompilerParams(
                dimension_semantics=("parallel",),
                vmem_limit_bytes=vmem_limit,
            ),
            cost_estimate=cost,
        )(x_in, wqkv, bqkv, gamma_p, beta_p)

    try:
        out_p = _run(True)
    except Exception:
        # Fallback for JAX versions without pl.Buffered / pipeline_mode support.
        out_p = _run(False)

    out = out_p
    if B_pad != B:
        out = out[:B]
    if pad_feat:
        out = out[:, :, :D]
    if out.dtype != x.dtype:
        out = out.astype(x.dtype)
    return out


# --------------------------------------------------------------------------------------
# Pure-JAX reference mirroring the PyTorch forward (eval mode)
# --------------------------------------------------------------------------------------
def time_att_reference(x, params, *, num_head, eps=1e-5):
    q = x @ params["wq"].T + params["bq"]
    k = x @ params["wk"].T + params["bk"]
    v = x @ params["wv"].T + params["bv"]
    kT = jnp.swapaxes(k, -2, -1)
    kd = jnp.sqrt(jnp.float32(kT.shape[-1]) / num_head)
    attn = jax.nn.softmax(q @ kT / kd, axis=-1) @ v                 # (B, T, D)
    heads = jnp.stack([attn] * num_head, axis=-1)                   # (B, T, D, H)
    result = jnp.squeeze(heads @ params["w1"].reshape(num_head, 1), -1) + params["b1"]
    y = x + result
    mean = jnp.mean(y, axis=-1, keepdims=True)
    var = jnp.mean((y - mean) ** 2, axis=-1, keepdims=True)
    return (y - mean) / jnp.sqrt(var + eps) * params["ln_w"] + params["ln_b"]


# --------------------------------------------------------------------------------------
# Self-test
# --------------------------------------------------------------------------------------
if __name__ == "__main__":
    def make_params(key, D, num_head):
        keys = jax.random.split(key, 10)
        s = 1.0 / jnp.sqrt(jnp.float32(D))
        return {
            "wq": jax.random.uniform(keys[0], (D, D), jnp.float32, -s, s),
            "bq": jax.random.uniform(keys[1], (D,), jnp.float32, -s, s),
            "wk": jax.random.uniform(keys[2], (D, D), jnp.float32, -s, s),
            "bk": jax.random.uniform(keys[3], (D,), jnp.float32, -s, s),
            "wv": jax.random.uniform(keys[4], (D, D), jnp.float32, -s, s),
            "bv": jax.random.uniform(keys[5], (D,), jnp.float32, -s, s),
            "w1": jax.random.uniform(keys[6], (num_head,), jnp.float32, -0.5, 0.5),
            "b1": jax.random.uniform(keys[7], (1,), jnp.float32, -0.5, 0.5),
            "ln_w": jax.random.uniform(keys[8], (D,), jnp.float32, 0.5, 1.5),
            "ln_b": jax.random.uniform(keys[9], (D,), jnp.float32, -0.1, 0.1),
        }

    def check(name, out, ref, atol, rtol):
        out = jax.block_until_ready(out)
        assert out.shape == ref.shape, f"{name}: shape {out.shape} vs {ref.shape}"
        assert jnp.allclose(out, ref, atol=atol, rtol=rtol), f"{name}: mismatch vs reference"

    root = jax.random.PRNGKey(0)
    k_param, k_x1, k_x2, k_x3, k_x4 = jax.random.split(root, 5)

    # Case 1: main config (dense attention path, padded feature dim D=32 -> 128).
    B, T, D, H = 4, 8, 32, 4
    params = make_params(k_param, D, H)
    x = jax.random.normal(k_x1, (B, T, D), jnp.float32)
    ref = time_att_reference(x, params, num_head=H)
    check("f32 dense", time_att_forward(x, params, num_head=H, mxu_dtype=jnp.float32),
          ref, 2e-3, 2e-3)
    check("bf16 dense", time_att_forward(x, params, num_head=H), ref, 1e-1, 1e-1)

    # Case 2: key-tiled (flash-style) online-softmax path.
    B2, T2 = 2, 16
    x2 = jax.random.normal(k_x2, (B2, T2, D), jnp.float32)
    ref2 = time_att_reference(x2, params, num_head=H)
    check("f32 flash",
          time_att_forward(x2, params, num_head=H, mxu_dtype=jnp.float32, kv_tile=8),
          ref2, 2e-3, 2e-3)
    check("bf16 flash", time_att_forward(x2, params, num_head=H, kv_tile=8),
          ref2, 1e-1, 1e-1)

    # Case 3: non-divisor batch (padded batch rows, forced b_blk).
    B3 = 3
    x3 = jax.random.normal(k_x3, (B3, T, D), jnp.float32)
    ref3 = time_att_reference(x3, params, num_head=H)
    check("f32 padded batch",
          time_att_forward(x3, params, num_head=H, mxu_dtype=jnp.float32, b_blk=2),
          ref3, 2e-3, 2e-3)

    # Case 4: lane-aligned feature dim (no wrapper-side pad/cast of x).
    D4, H4 = 128, 2
    params4 = make_params(k_param, D4, H4)
    x4 = jax.random.normal(k_x4, (2, T, D4), jnp.float32)
    ref4 = time_att_reference(x4, params4, num_head=H4)
    check("f32 aligned D",
          time_att_forward(x4, params4, num_head=H4, mxu_dtype=jnp.float32),
          ref4, 2e-3, 2e-3)

    print("KERNEL_OK")
</pallas_src>

<mosaic_0001>
module attributes {stable_mosaic.version = 11 : i64} {
  func.func @_time_att_kernel(%arg0: i32, %arg1: memref<2x8x128xf32, #tpu.memory_space<vmem>>, %arg2: memref<128x384xf32, #tpu.memory_space<vmem>>, %arg3: memref<1x384xf32, #tpu.memory_space<vmem>>, %arg4: memref<1x128xf32, #tpu.memory_space<vmem>>, %arg5: memref<1x128xf32, #tpu.memory_space<vmem>>, %arg6: memref<2x8x128xf32, #tpu.memory_space<vmem>>) attributes {dimension_semantics = [#tpu.dimension_semantics<parallel>], iteration_bounds = array<i64: 2>, scalar_prefetch = 0 : i64, scratch_operands = 0 : i64, tpu.core_type = #tpu.core_type<tc>, window_params = [{transform_indices = @transform_0, window_bounds = array<i64: 2, 8, 128>}, {pipeline_mode = #tpu.pipeline_mode<synchronous>, transform_indices = @transform_1, window_bounds = array<i64: 128, 384>}, {pipeline_mode = #tpu.pipeline_mode<synchronous>, transform_indices = @transform_2, window_bounds = array<i64: 1, 384>}, {pipeline_mode = #tpu.pipeline_mode<synchronous>, transform_indices = @transform_3, window_bounds = array<i64: 1, 128>}, {pipeline_mode = #tpu.pipeline_mode<synchronous>, transform_indices = @transform_4, window_bounds = array<i64: 1, 128>}, {transform_indices = @transform_5, window_bounds = array<i64: 2, 8, 128>}]} {
    %c0 = arith.constant 0 : index
    %c0_0 = arith.constant 0 : index
    %c0_1 = arith.constant 0 : index
    %0 = vector.load %arg1[%c0, %c0_0, %c0_1] : memref<2x8x128xf32, #tpu.memory_space<vmem>>, vector<2x8x128xf32>
    %1 = vector.shape_cast %0 : vector<2x8x128xf32> to vector<16x128xf32>
    %c0_2 = arith.constant 0 : index
    %c0_3 = arith.constant 0 : index
    %2 = vector.load %arg2[%c0_2, %c0_3] : memref<128x384xf32, #tpu.memory_space<vmem>>, vector<128x384xf32>
    %cst = arith.constant dense<0.000000e+00> : vector<16x384xf32>
    %3 = tpu.matmul %1, %2, %cst {dimension_numbers = #tpu.dot_dimension_numbers<[1], [0], [0], [1], [0, 0, 1, 1], [], []>} : vector<16x128xf32>, vector<128x384xf32>, vector<16x384xf32> -> vector<16x384xf32>
    %c0_4 = arith.constant 0 : index
    %c0_5 = arith.constant 0 : index
    %4 = vector.load %arg3[%c0_4, %c0_5] : memref<1x384xf32, #tpu.memory_space<vmem>>, vector<1x384xf32>
    %5 = vector.broadcast %4 : vector<1x384xf32> to vector<16x384xf32>
    %6 = arith.addf %3, %5 : vector<16x384xf32>
    %7 = vector.shape_cast %6 : vector<16x384xf32> to vector<2x8x384xf32>
    %8 = vector.extract_strided_slice %7 {offsets = [0, 0, 0], sizes = [2, 8, 128], strides = [1, 1, 1]} : vector<2x8x384xf32> to vector<2x8x128xf32>
    %9 = vector.extract_strided_slice %7 {offsets = [0, 0, 128], sizes = [2, 8, 128], strides = [1, 1, 1]} : vector<2x8x384xf32> to vector<2x8x128xf32>
    %10 = vector.extract_strided_slice %7 {offsets = [0, 0, 256], sizes = [2, 8, 128], strides = [1, 1, 1]} : vector<2x8x384xf32> to vector<2x8x128xf32>
    "tpu.trace_start"() <{level = 10 : i32, message = "btd,bsd->bts"}> : () -> ()
    %cst_6 = arith.constant dense<0.000000e+00> : vector<2x8x8xf32>
    %11 = tpu.matmul %8, %9, %cst_6 {dimension_numbers = #tpu.dot_dimension_numbers<[2], [2], [1], [1], [0, 0, 0, 1, 1, 1], [0], [0]>} : vector<2x8x128xf32>, vector<2x8x128xf32>, vector<2x8x8xf32> -> vector<2x8x8xf32>
    "tpu.trace_stop"() : () -> ()
    %cst_7 = arith.constant dense<0xFF800000> : vector<2x8xf32>
    %12 = vector.multi_reduction <maximumf>, %11, %cst_7 [2] : vector<2x8x8xf32> to vector<2x8xf32>
    %13 = vector.shape_cast %12 : vector<2x8xf32> to vector<2x8x1xf32>
    %14 = vector.broadcast %13 : vector<2x8x1xf32> to vector<2x8x8xf32>
    %15 = arith.subf %11, %14 : vector<2x8x8xf32>
    %16 = math.exp %15 : vector<2x8x8xf32>
    %cst_8 = arith.constant dense<0.000000e+00> : vector<2x8xf32>
    %17 = vector.multi_reduction <add>, %16, %cst_8 [2] : vector<2x8x8xf32> to vector<2x8xf32>
    %18 = vector.shape_cast %17 : vector<2x8xf32> to vector<2x8x1xf32>
    "tpu.trace_start"() <{level = 10 : i32, message = "bts,bsd->btd"}> : () -> ()
    %cst_9 = arith.constant dense<0.000000e+00> : vector<2x8x128xf32>
    %19 = tpu.matmul %16, %10, %cst_9 {dimension_numbers = #tpu.dot_dimension_numbers<[2], [1], [1], [2], [0, 0, 0, 1, 1, 2], [0], [0]>} : vector<2x8x8xf32>, vector<2x8x128xf32>, vector<2x8x128xf32> -> vector<2x8x128xf32>
    "tpu.trace_stop"() : () -> ()
    %20 = tpu.reciprocal %18 : vector<2x8x1xf32> -> vector<2x8x1xf32>
    %21 = vector.broadcast %20 : vector<2x8x1xf32> to vector<2x8x128xf32>
    %22 = arith.mulf %19, %21 : vector<2x8x128xf32>
    %23 = arith.addf %0, %22 : vector<2x8x128xf32>
    %cst_10 = arith.constant 1.000000e+00 : f32
    %cst_11 = arith.constant 3.200000e+01 : f32
    %24 = arith.divf %cst_10, %cst_11 : f32
    %cst_12 = arith.constant dense<0.000000e+00> : vector<2x8xf32>
    %25 = vector.multi_reduction <add>, %23, %cst_12 [2] : vector<2x8x128xf32> to vector<2x8xf32>
    %26 = vector.shape_cast %25 : vector<2x8xf32> to vector<2x8x1xf32>
    %27 = vector.broadcast %24 : f32 to vector<2x8x1xf32>
    %28 = arith.mulf %26, %27 : vector<2x8x1xf32>
    %29 = vector.broadcast %28 : vector<2x8x1xf32> to vector<2x8x128xf32>
    %30 = arith.subf %23, %29 : vector<2x8x128xf32>
    %31 = arith.mulf %30, %30 : vector<2x8x128xf32>
    %cst_13 = arith.constant dense<0.000000e+00> : vector<2x8xf32>
    %32 = vector.multi_reduction <add>, %31, %cst_13 [2] : vector<2x8x128xf32> to vector<2x8xf32>
    %33 = vector.shape_cast %32 : vector<2x8xf32> to vector<2x8x1xf32>
    %34 = arith.mulf %28, %28 : vector<2x8x1xf32>
    %cst_14 = arith.constant 9.600000e+01 : f32
    %35 = vector.broadcast %cst_14 : f32 to vector<2x8x1xf32>
    %36 = arith.mulf %35, %34 : vector<2x8x1xf32>
    %37 = arith.subf %33, %36 : vector<2x8x1xf32>
    %38 = vector.broadcast %24 : f32 to vector<2x8x1xf32>
    %39 = arith.mulf %37, %38 : vector<2x8x1xf32>
    %cst_15 = arith.constant 9.99999974E-6 : f32
    %40 = vector.broadcast %cst_15 : f32 to vector<2x8x1xf32>
    %41 = arith.addf %39, %40 : vector<2x8x1xf32>
    %42 = math.rsqrt %41 : vector<2x8x1xf32>
    %43 = vector.broadcast %42 : vector<2x8x1xf32> to vector<2x8x128xf32>
    %44 = arith.mulf %30, %43 : vector<2x8x128xf32>
    %c0_16 = arith.constant 0 : index
    %c0_17 = arith.constant 0 : index
    %45 = vector.load %arg4[%c0_16, %c0_17] : memref<1x128xf32, #tpu.memory_space<vmem>>, vector<1x128xf32>
    %46 = vector.shape_cast %45 : vector<1x128xf32> to vector<1x1x128xf32>
    %47 = vector.broadcast %46 : vector<1x1x128xf32> to vector<2x8x128xf32>
    %48 = arith.mulf %44, %47 : vector<2x8x128xf32>
    %c0_18 = arith.constant 0 : index
    %c0_19 = arith.constant 0 : index
    %49 = vector.load %arg5[%c0_18, %c0_19] : memref<1x128xf32, #tpu.memory_space<vmem>>, vector<1x128xf32>
    %50 = vector.shape_cast %49 : vector<1x128xf32> to vector<1x1x128xf32>
    %51 = vector.broadcast %50 : vector<1x1x128xf32> to vector<2x8x128xf32>
    %52 = arith.addf %48, %51 : vector<2x8x128xf32>
    %c0_20 = arith.constant 0 : index
    %c0_21 = arith.constant 0 : index
    %c0_22 = arith.constant 0 : index
    %53 = vector.load %arg6[%c0_20, %c0_21, %c0_22] : memref<2x8x128xf32, #tpu.memory_space<vmem>>, vector<2x8x128xf32>
    tpu.vector_store %arg6[%c0_20, %c0_21, %c0_22], %52 {strides = array<i32>} : memref<2x8x128xf32, #tpu.memory_space<vmem>>, vector<2x8x128xf32>,
    return
  }
  func.func @transform_0(%arg0: i32) -> (i32, i32, i32) {
    %c0_i32 = arith.constant 0 : i32
    %c0_i32_0 = arith.constant 0 : i32
    %c0_i32_1 = arith.constant 0 : i32
    return %arg0, %c0_i32, %c0_i32_0 : i32, i32, i32
  }
  func.func @transform_1(%arg0: i32) -> (i32, i32) {
    %c0_i32 = arith.constant 0 : i32
    %c0_i32_0 = arith.constant 0 : i32
    %c0_i32_1 = arith.constant 0 : i32
    return %c0_i32, %c0_i32_0 : i32, i32
  }
  func.func @transform_2(%arg0: i32) -> (i32, i32) {
    %c0_i32 = arith.constant 0 : i32
    %c0_i32_0 = arith.constant 0 : i32
    %c0_i32_1 = arith.constant 0 : i32
    return %c0_i32, %c0_i32_0 : i32, i32
  }
  func.func @transform_3(%arg0: i32) -> (i32, i32) {
    %c0_i32 = arith.constant 0 : i32
    %c0_i32_0 = arith.constant 0 : i32
    %c0_i32_1 = arith.constant 0 : i32
    return %c0_i32, %c0_i32_0 : i32, i32
  }
  func.func @transform_4(%arg0: i32) -> (i32, i32) {
    %c0_i32 = arith.constant 0 : i32
    %c0_i32_0 = arith.constant 0 : i32
    %c0_i32_1 = arith.constant 0 : i32
    return %c0_i32, %c0_i32_0 : i32, i32
  }
  func.func @transform_5(%arg0: i32) -> (i32, i32, i32) {
    %c0_i32 = arith.constant 0 : i32
    %c0_i32_0 = arith.constant 0 : i32
    %c0_i32_1 = arith.constant 0 : i32
    return %arg0, %c0_i32, %c0_i32_0 : i32, i32, i32
  }
}

module attributes {stable_mosaic.version = 11 : i64} {
  func.func @_time_att_kernel(%arg0: i32, %arg1: memref<2x8x128xf32, #tpu.memory_space<vmem>>, %arg2: memref<128x384xf32, #tpu.memory_space<vmem>>, %arg3: memref<1x384xf32, #tpu.memory_space<vmem>>, %arg4: memref<1x128xf32, #tpu.memory_space<vmem>>, %arg5: memref<1x128xf32, #tpu.memory_space<vmem>>, %arg6: memref<2x8x128xf32, #tpu.memory_space<vmem>>) attributes {dimension_semantics = [#tpu.dimension_semantics<parallel>], iteration_bounds = array<i64: 2>, scalar_prefetch = 0 : i64, scratch_operands = 0 : i64, tpu.core_type = #tpu.core_type<tc>, window_params = [{transform_indices = @transform_0, window_bounds = array<i64: 2, 8, 128>}, {pipeline_mode = #tpu.pipeline_mode<synchronous>, transform_indices = @transform_1, window_bounds = array<i64: 128, 384>}, {pipeline_mode = #tpu.pipeline_mode<synchronous>, transform_indices = @transform_2, window_bounds = array<i64: 1, 384>}, {pipeline_mode = #tpu.pipeline_mode<synchronous>, transform_indices = @transform_3, window_bounds = array<i64: 1, 128>}, {pipeline_mode = #tpu.pipeline_mode<synchronous>, transform_indices = @transform_4, window_bounds = array<i64: 1, 128>}, {transform_indices = @transform_5, window_bounds = array<i64: 2, 8, 128>}]} {
    %c0 = arith.constant 0 : index
    %c0_0 = arith.constant 0 : index
    %c0_1 = arith.constant 0 : index
    %0 = vector.load %arg1[%c0, %c0_0, %c0_1] : memref<2x8x128xf32, #tpu.memory_space<vmem>>, vector<2x8x128xf32>
    %1 = vector.shape_cast %0 : vector<2x8x128xf32> to vector<16x128xf32>
    %c0_2 = arith.constant 0 : index
    %c0_3 = arith.constant 0 : index
    %2 = vector.load %arg2[%c0_2, %c0_3] : memref<128x384xf32, #tpu.memory_space<vmem>>, vector<128x384xf32>
    %cst = arith.constant dense<0.000000e+00> : vector<16x384xf32>
    %3 = tpu.matmul %1, %2, %cst {dimension_numbers = #tpu.dot_dimension_numbers<[1], [0], [0], [1], [0, 0, 1, 1], [], []>} : vector<16x128xf32>, vector<128x384xf32>, vector<16x384xf32> -> vector<16x384xf32>
    %c0_4 = arith.constant 0 : index
    %c0_5 = arith.constant 0 : index
    %4 = vector.load %arg3[%c0_4, %c0_5] : memref<1x384xf32, #tpu.memory_space<vmem>>, vector<1x384xf32>
    %5 = vector.broadcast %4 : vector<1x384xf32> to vector<16x384xf32>
    %6 = arith.addf %3, %5 : vector<16x384xf32>
    %7 = vector.shape_cast %6 : vector<16x384xf32> to vector<2x8x384xf32>
    %8 = vector.extract_strided_slice %7 {offsets = [0, 0, 0], sizes = [2, 8, 128], strides = [1, 1, 1]} : vector<2x8x384xf32> to vector<2x8x128xf32>
    %9 = vector.extract_strided_slice %7 {offsets = [0, 0, 128], sizes = [2, 8, 128], strides = [1, 1, 1]} : vector<2x8x384xf32> to vector<2x8x128xf32>
    %10 = vector.extract_strided_slice %7 {offsets = [0, 0, 256], sizes = [2, 8, 128], strides = [1, 1, 1]} : vector<2x8x384xf32> to vector<2x8x128xf32>
    "tpu.trace_start"() <{level = 10 : i32, message = "btd,bsd->bts"}> : () -> ()
    %cst_6 = arith.constant dense<0.000000e+00> : vector<2x8x8xf32>
    %11 = tpu.matmul %8, %9, %cst_6 {dimension_numbers = #tpu.dot_dimension_numbers<[2], [2], [1], [1], [0, 0, 0, 1, 1, 1], [0], [0]>} : vector<2x8x128xf32>, vector<2x8x128xf32>, vector<2x8x8xf32> -> vector<2x8x8xf32>
    "tpu.trace_stop"() : () -> ()
    %cst_7 = arith.constant dense<0xFF800000> : vector<2x8xf32>
    %12 = vector.multi_reduction <maximumf>, %11, %cst_7 [2] : vector<2x8x8xf32> to vector<2x8xf32>
    %13 = vector.shape_cast %12 : vector<2x8xf32> to vector<2x8x1xf32>
    %14 = vector.broadcast %13 : vector<2x8x1xf32> to vector<2x8x8xf32>
    %15 = arith.subf %11, %14 : vector<2x8x8xf32>
    %16 = math.exp %15 : vector<2x8x8xf32>
    %cst_8 = arith.constant dense<0.000000e+00> : vector<2x8xf32>
    %17 = vector.multi_reduction <add>, %16, %cst_8 [2] : vector<2x8x8xf32> to vector<2x8xf32>
    %18 = vector.shape_cast %17 : vector<2x8xf32> to vector<2x8x1xf32>
    "tpu.trace_start"() <{level = 10 : i32, message = "bts,bsd->btd"}> : () -> ()
    %cst_9 = arith.constant dense<0.000000e+00> : vector<2x8x128xf32>
    %19 = tpu.matmul %16, %10, %cst_9 {dimension_numbers = #tpu.dot_dimension_numbers<[2], [1], [1], [2], [0, 0, 0, 1, 1, 2], [0], [0]>} : vector<2x8x8xf32>, vector<2x8x128xf32>, vector<2x8x128xf32> -> vector<2x8x128xf32>
    "tpu.trace_stop"() : () -> ()
    %20 = tpu.reciprocal %18 : vector<2x8x1xf32> -> vector<2x8x1xf32>
    %21 = vector.broadcast %20 : vector<2x8x1xf32> to vector<2x8x128xf32>
    %22 = arith.mulf %19, %21 : vector<2x8x128xf32>
    %23 = arith.addf %0, %22 : vector<2x8x128xf32>
    %cst_10 = arith.constant 1.000000e+00 : f32
    %cst_11 = arith.constant 3.200000e+01 : f32
    %24 = arith.divf %cst_10, %cst_11 : f32
    %cst_12 = arith.constant dense<0.000000e+00> : vector<2x8xf32>
    %25 = vector.multi_reduction <add>, %23, %cst_12 [2] : vector<2x8x128xf32> to vector<2x8xf32>
    %26 = vector.shape_cast %25 : vector<2x8xf32> to vector<2x8x1xf32>
    %27 = vector.broadcast %24 : f32 to vector<2x8x1xf32>
    %28 = arith.mulf %26, %27 : vector<2x8x1xf32>
    %29 = vector.broadcast %28 : vector<2x8x1xf32> to vector<2x8x128xf32>
    %30 = arith.subf %23, %29 : vector<2x8x128xf32>
    %31 = arith.mulf %30, %30 : vector<2x8x128xf32>
    %cst_13 = arith.constant dense<0.000000e+00> : vector<2x8xf32>
    %32 = vector.multi_reduction <add>, %31, %cst_13 [2] : vector<2x8x128xf32> to vector<2x8xf32>
    %33 = vector.shape_cast %32 : vector<2x8xf32> to vector<2x8x1xf32>
    %34 = arith.mulf %28, %28 : vector<2x8x1xf32>
    %cst_14 = arith.constant 9.600000e+01 : f32
    %35 = vector.broadcast %cst_14 : f32 to vector<2x8x1xf32>
    %36 = arith.mulf %35, %34 : vector<2x8x1xf32>
    %37 = arith.subf %33, %36 : vector<2x8x1xf32>
    %38 = vector.broadcast %24 : f32 to vector<2x8x1xf32>
    %39 = arith.mulf %37, %38 : vector<2x8x1xf32>
    %cst_15 = arith.constant 9.99999974E-6 : f32
    %40 = vector.broadcast %cst_15 : f32 to vector<2x8x1xf32>
    %41 = arith.addf %39, %40 : vector<2x8x1xf32>
    %42 = math.rsqrt %41 : vector<2x8x1xf32>
    %43 = vector.broadcast %42 : vector<2x8x1xf32> to vector<2x8x128xf32>
    %44 = arith.mulf %30, %43 : vector<2x8x128xf32>
    %c0_16 = arith.constant 0 : index
    %c0_17 = arith.constant 0 : index
    %45 = vector.load %arg4[%c0_16, %c0_17] : memref<1x128xf32, #tpu.memory_space<vmem>>, vector<1x128xf32>
    %46 = vector.shape_cast %45 : vector<1x128xf32> to vector<1x1x128xf32>
    %47 = vector.broadcast %46 : vector<1x1x128xf32> to vector<2x8x128xf32>
    %48 = arith.mulf %44, %47 : vector<2x8x128xf32>
    %c0_18 = arith.constant 0 : index
    %c0_19 = arith.constant 0 : index
    %49 = vector.load %arg5[%c0_18, %c0_19] : memref<1x128xf32, #tpu.memory_space<vmem>>, vector<1x128xf32>
    %50 = vector.shape_cast %49 : vector<1x128xf32> to vector<1x1x128xf32>
    %51 = vector.broadcast %50 : vector<1x1x128xf32> to vector<2x8x128xf32>
    %52 = arith.addf %48, %51 : vector<2x8x128xf32>
    %c0_20 = arith.constant 0 : index
    %c0_21 = arith.constant 0 : index
    %c0_22 = arith.constant 0 : index
    %53 = vector.load %arg6[%c0_20, %c0_21, %c0_22] : memref<2x8x128xf32, #tpu.memory_space<vmem>>, vector<2x8x128xf32>
    tpu.vector_store %arg6[%c0_20, %c0_21, %c0_22], %52 {strides = array<i32>} : memref<2x8x128xf32, #tpu.memory_space<vmem>>, vector<2x8x128xf32>,
    return
  }
  func.func @transform_0(%arg0: i32) -> (i32, i32, i32) {
    %c0_i32 = arith.constant 0 : i32
    %c0_i32_0 = arith.constant 0 : i32
    %c0_i32_1 = arith.constant 0 : i32
    return %arg0, %c0_i32, %c0_i32_0 : i32, i32, i32
  }
  func.func @transform_1(%arg0: i32) -> (i32, i32) {
    %c0_i32 = arith.constant 0 : i32
    %c0_i32_0 = arith.constant 0 : i32
    %c0_i32_1 = arith.constant 0 : i32
    return %c0_i32, %c0_i32_0 : i32, i32
  }
  func.func @transform_2(%arg0: i32) -> (i32, i32) {
    %c0_i32 = arith.constant 0 : i32
    %c0_i32_0 = arith.constant 0 : i32
    %c0_i32_1 = arith.constant 0 : i32
    return %c0_i32, %c0_i32_0 : i32, i32
  }
  func.func @transform_3(%arg0: i32) -> (i32, i32) {
    %c0_i32 = arith.constant 0 : i32
    %c0_i32_0 = arith.constant 0 : i32
    %c0_i32_1 = arith.constant 0 : i32
    return %c0_i32, %c0_i32_0 : i32, i32
  }
  func.func @transform_4(%arg0: i32) -> (i32, i32) {
    %c0_i32 = arith.constant 0 : i32
    %c0_i32_0 = arith.constant 0 : i32
    %c0_i32_1 = arith.constant 0 : i32
    return %c0_i32, %c0_i32_0 : i32, i32
  }
  func.func @transform_5(%arg0: i32) -> (i32, i32, i32) {
    %c0_i32 = arith.constant 0 : i32
    %c0_i32_0 = arith.constant 0 : i32
    %c0_i32_1 = arith.constant 0 : i32
    return %arg0, %c0_i32, %c0_i32_0 : i32, i32, i32
  }
}

</mosaic_0001>

<llo_original>
// kernel: tpu_custom_call.1
$region0: #{tpu_custom_call.1}
  #allocation0 [shape = 'u32[]', space=smem, size = 0x4, offset = 0x4, fixed_abs, tag = 'smem constant byte address 0x4 - core index']
  #allocation1 [shape = 'u32[144,128]{1,0:T(1,128)}', space=vmem, size = 0x12000, scoped, tag = 'internal scratch']
  %s0 = inlined_call_operand.hbm [shape: f32[4,8,128], index: 0, kind: input, shape index: {}]
  %s1 = inlined_call_operand.hbm [shape: f32[128,384], index: 1, kind: input, shape index: {}]
  %s2 = inlined_call_operand.vmem [shape: f32[1,384], index: 2, kind: input, shape index: {}]
  %s3 = inlined_call_operand.vmem [shape: f32[1,128], index: 3, kind: input, shape index: {}]
  %s4 = inlined_call_operand.vmem [shape: f32[1,128], index: 4, kind: input, shape index: {}]
  %s5 = inlined_call_operand.hbm [shape: f32[4,8,128], index: 5, kind: output, shape index: {}]
  %s6 = sld [smem:[#allocation0]]
  $region61: #{tpu_custom_call.1} parent=0
    _
  %s8 = ssub.s32 1, %s6
  %s9 = scalar_select 0, %s8, %s6
  $region1: #{tpu_custom_call.1} parent=0
    #allocation2 [shape = 'u8[16384]{0}', space=vmem, size = 0x4000, scoped, tag = 'input window, operand 0']
    #allocation3 [shape = 's32[2]{0}', space=sflag, size = 0x8, scoped, tag = 'scoped memory for tpu_custom_call.1']
    #allocation4 [shape = 's32[2]{0}', space=sflag, size = 0x8, scoped, tag = 'scoped memory for tpu_custom_call.1']
    #allocation5 [shape = 'u8[196608]{0}', space=vmem, size = 0x30000, scoped, tag = 'input window, operand 1, single buffered']
    #allocation6 [shape = 's32[1]{0}', space=sflag, size = 0x4, scoped, tag = 'scoped memory for tpu_custom_call.1']
    #allocation7 [shape = 'u8[16384]{0}', space=vmem, size = 0x4000, scoped, tag = 'output window, operand 0']
    %10 = vsyncpa [#allocation3], 0
    %s11 = scalar_lea.sflag [#allocation3], 1
    %12 = vsyncpa %s11, 0
    %13 = vsyncpa [#allocation6], 0
    %14 = vsyncpa [#allocation4], 0
    %s15 = scalar_lea.sflag [#allocation4], 1
    %16 = vsyncpa %s15, 0
    loop: start=0, step=1, limit=4
    $region2: #{tpu_custom_call.1} parent=1 // loop_pre_header
      _
    $region3: #{tpu_custom_call.1} parent=1 // loop_header
      %s18 = sphi 0, %s22
      %p19 = scmp.ge.s32.totalorder %s18, 4
      %s28 = sphi 0, %s30
      %s31 = sphi 0, %s28
      %s32 = sphi 0, %s31
      %s48 = sphi 0, %s32
      %s52 = sphi 0, %s52
      %s54 = sphi 0, %s52
      %s55 = sphi 0, %s54
      %s69 = sphi 0, %s55
      %s73 = sphi 0, %s73
      %s75 = sphi 0, %s73
      %s76 = sphi 0, %s75
      %s90 = sphi 0, %s76
      %s94 = sphi 0, %s94
      %s96 = sphi 0, %s94
      %s97 = sphi 0, %s96
      %s111 = sphi 0, %s97
      %s115 = sphi 0, %s115
      %s117 = sphi 0, %s115
      %s118 = sphi 0, %s117
      %s132 = sphi 0, %s118
      %s138 = sphi 0, %s140
      %s141 = sphi 0, %s138
      %s142 = sphi 0, %s141
      %s158 = sphi 0, %s142
    $region4: #{tpu_custom_call.1} parent=1 // loop_header_branch
      %21 = sbr.rel (%p19) target = $region8
    $region5: #{tpu_custom_call.1} parent=1 // loop_body
      %s23 = ssub.s32 %s18, 1
      %s24 = ssub.s32 %s18, 2
      %s25 = sadd.s32 %s18, 1
      %s26 = ssub.s32 %s18, %s25
      %p27 = scmp.eq.s32.totalorder %s26, 0
      %s29 = sadd.s32 %s28, 1
      %s30 = scalar_select %p27, %s28, %s29
      %p33 = pneg %p27
      %p34 = scmp.eq.s32.totalorder %s18, 1
      %p35 = por %p33, %p34
      %p36 = scmp.ne.s32.totalorder %s28, %s31
      %p37 = scmp.eq.s32.totalorder %s18, 0
      %p38 = por %p36, %p37
      %p39 = scmp.ne.s32.totalorder %s28, %s31
      %p40 = scmp.eq.s32.totalorder %s23, 1
      %p41 = por %p39, %p40
      %p42 = scmp.ne.s32.totalorder %s31, %s32
      %p43 = scmp.eq.s32.totalorder %s23, 0
      %p44 = por %p42, %p43
      %p45 = scmp.ne.s32.totalorder %s31, %s32
      %p46 = scmp.eq.s32.totalorder %s24, 1
      %p47 = por %p45, %p46
      %p49 = scmp.ne.s32.totalorder %s32, %s48
      %p50 = scmp.eq.s32.totalorder %s24, 0
      %p51 = por %p49, %p50
      %s53 = sadd.s32 %s52, 1
      %p56 = scmp.eq.s32.totalorder %s18, 1
      %p57 = scmp.ne.s32.totalorder %s52, %s54
      %p58 = scmp.eq.s32.totalorder %s18, 0
      %p59 = por %p57, %p58
      %p60 = scmp.ne.s32.totalorder %s52, %s54
      %p61 = scmp.eq.s32.totalorder %s23, 1
      %p62 = por %p60, %p61
      %p63 = scmp.ne.s32.totalorder %s54, %s55
      %p64 = scmp.eq.s32.totalorder %s23, 0
      %p65 = por %p63, %p64
      %p66 = scmp.ne.s32.totalorder %s54, %s55
      %p67 = scmp.eq.s32.totalorder %s24, 1
      %p68 = por %p66, %p67
      %p70 = scmp.ne.s32.totalorder %s55, %s69
      %p71 = scmp.eq.s32.totalorder %s24, 0
      %p72 = por %p70, %p71
      %s74 = sadd.s32 %s73, 1
      %p77 = scmp.eq.s32.totalorder %s18, 1
      %p78 = scmp.ne.s32.totalorder %s73, %s75
      %p79 = scmp.eq.s32.totalorder %s18, 0
      %p80 = por %p78, %p79
      %p81 = scmp.ne.s32.totalorder %s73, %s75
      %p82 = scmp.eq.s32.totalorder %s23, 1
      %p83 = por %p81, %p82
      %p84 = scmp.ne.s32.totalorder %s75, %s76
      %p85 = scmp.eq.s32.totalorder %s23, 0
      %p86 = por %p84, %p85
      %p87 = scmp.ne.s32.totalorder %s75, %s76
      %p88 = scmp.eq.s32.totalorder %s24, 1
      %p89 = por %p87, %p88
      %p91 = scmp.ne.s32.totalorder %s76, %s90
      %p92 = scmp.eq.s32.totalorder %s24, 0
      %p93 = por %p91, %p92
      %s95 = sadd.s32 %s94, 1
      %p98 = scmp.eq.s32.totalorder %s18, 1
      %p99 = scmp.ne.s32.totalorder %s94, %s96
      %p100 = scmp.eq.s32.totalorder %s18, 0
      %p101 = por %p99, %p100
      %p102 = scmp.ne.s32.totalorder %s94, %s96
      %p103 = scmp.eq.s32.totalorder %s23, 1
      %p104 = por %p102, %p103
      %p105 = scmp.ne.s32.totalorder %s96, %s97
      %p106 = scmp.eq.s32.totalorder %s23, 0
      %p107 = por %p105, %p106
      %p108 = scmp.ne.s32.totalorder %s96, %s97
      %p109 = scmp.eq.s32.totalorder %s24, 1
      %p110 = por %p108, %p109
      %p112 = scmp.ne.s32.totalorder %s97, %s111
      %p113 = scmp.eq.s32.totalorder %s24, 0
      %p114 = por %p112, %p113
      %s116 = sadd.s32 %s115, 1
      %p119 = scmp.eq.s32.totalorder %s18, 1
      %p120 = scmp.ne.s32.totalorder %s115, %s117
      %p121 = scmp.eq.s32.totalorder %s18, 0
      %p122 = por %p120, %p121
      %p123 = scmp.ne.s32.totalorder %s115, %s117
      %p124 = scmp.eq.s32.totalorder %s23, 1
      %p125 = por %p123, %p124
      %p126 = scmp.ne.s32.totalorder %s117, %s118
      %p127 = scmp.eq.s32.totalorder %s23, 0
      %p128 = por %p126, %p127
      %p129 = scmp.ne.s32.totalorder %s117, %s118
      %p130 = scmp.eq.s32.totalorder %s24, 1
      %p131 = por %p129, %p130
      %p133 = scmp.ne.s32.totalorder %s118, %s132
      %p134 = scmp.eq.s32.totalorder %s24, 0
      %p135 = por %p133, %p134
      %s136 = ssub.s32 %s18, %s25
      %p137 = scmp.eq.s32.totalorder %s136, 0
      %s139 = sadd.s32 %s138, 1
      %s140 = scalar_select %p137, %s138, %s139
      %p143 = pneg %p137
      %p144 = scmp.eq.s32.totalorder %s18, 1
      %p145 = por %p143, %p144
      %p146 = scmp.ne.s32.totalorder %s138, %s141
      %p147 = scmp.eq.s32.totalorder %s18, 0
      %p148 = por %p146, %p147
      %p149 = scmp.ne.s32.totalorder %s138, %s141
      %p150 = scmp.eq.s32.totalorder %s23, 1
      %p151 = por %p149, %p150
      %p152 = scmp.ne.s32.totalorder %s141, %s142
      %p153 = scmp.eq.s32.totalorder %s23, 0
      %p154 = por %p152, %p153
      %p155 = scmp.ne.s32.totalorder %s141, %s142
      %p156 = scmp.eq.s32.totalorder %s24, 1
      %p157 = por %p155, %p156
      %p159 = scmp.ne.s32.totalorder %s142, %s158
      %p160 = scmp.eq.s32.totalorder %s24, 0
      %p161 = por %p159, %p160
      %p162 = scmp.le.s32.totalorder 1, %s18
      %p163 = scmp.lt.s32.totalorder %s18, 3
      %p164 = pnand %p162, %p163
      %p165 = pneg %p164
      // Predicated region
      $region9: #{tpu_custom_call.1} parent=5 // pred_check
        _
      $region10: #{tpu_custom_call.1} parent=5 // pred_check_branch
        %167 = sbr.rel (%p164) target = $region12
      $region11: #{tpu_custom_call.1} parent=5 // pred_region
        %s168 = ssub.s32 %s18, 1
        // Predicated region
        $region13: #{tpu_custom_call.1} parent=11 // pred_check
          %p169 = pneg %p65
        $region14: #{tpu_custom_call.1} parent=11 // pred_check_branch
          %171 = sbr.rel (%p169) target = $region16
        $region15: #{tpu_custom_call.1} parent=11 // pred_region
          %s173 = ssub.s32 6144, 6144
          %174 = vsyncadd [#allocation6], %s173
          %s175 = sshll.u32 [#allocation5], 4
          %s176 = int_to_ptr.vmem [resolvable:$true] %s175
          %181 = dma.hbm_to_vmem [thread:$0]  %s1, 6144, %s176, [#allocation6], 384, 384, 24
        $region16: #{tpu_custom_call.1} parent=11 // pred_fallthru
          _
        // Predicated region
        $region17: #{tpu_custom_call.1} parent=11 // pred_check
          %p182 = pneg %p86
        $region18: #{tpu_custom_call.1} parent=11 // pred_check_branch
          %184 = sbr.rel (%p182) target = $region20
        $region19: #{tpu_custom_call.1} parent=11 // pred_region
          _
        $region20: #{tpu_custom_call.1} parent=11 // pred_fallthru
          _
        // Predicated region
        $region21: #{tpu_custom_call.1} parent=11 // pred_check
          %p185 = pneg %p107
        $region22: #{tpu_custom_call.1} parent=11 // pred_check_branch
          %187 = sbr.rel (%p185) target = $region24
        $region23: #{tpu_custom_call.1} parent=11 // pred_region
          _
        $region24: #{tpu_custom_call.1} parent=11 // pred_fallthru
          _
        // Predicated region
        $region25: #{tpu_custom_call.1} parent=11 // pred_check
          %p188 = pneg %p128
        $region26: #{tpu_custom_call.1} parent=11 // pred_check_branch
          %190 = sbr.rel (%p188) target = $region28
        $region27: #{tpu_custom_call.1} parent=11 // pred_region
          _
        $region28: #{tpu_custom_call.1} parent=11 // pred_fallthru
          _
      $region12: #{tpu_custom_call.1} parent=5 // pred_fallthru
        _
      %p191 = scmp.lt.s32.totalorder %s18, 2
      // Predicated region
      $region29: #{tpu_custom_call.1} parent=5 // pred_check
        %p192 = pneg %p191
      $region30: #{tpu_custom_call.1} parent=5 // pred_check_branch
        %194 = sbr.rel (%p192) target = $region32
      $region31: #{tpu_custom_call.1} parent=5 // pred_region
        // Predicated region
        $region33: #{tpu_custom_call.1} parent=31 // pred_check
          %p195 = pneg %p38
        $region34: #{tpu_custom_call.1} parent=31 // pred_check_branch
          %197 = sbr.rel (%p195) target = $region36
        $region35: #{tpu_custom_call.1} parent=31 // pred_region
          %s198 = sand.u32 %s28, 1
          %s199 = scalar_lea.sflag [#allocation3], %s198
          %s200 = sand.u32 %s28, 1
          %s201 = smul.addr %s200, 16
          %s202 = scalar_lea.vmem [#allocation2], %s201
          %s203 = smul.u32 2, %s18
          %s205 = ssub.s32 256, 256
          %206 = vsyncadd %s199, %s205
          %s207 = smul.addr %s203, 128
          %s208 = scalar_lea.hbm %s0, %s207
          %s209 = sshll.u32 %s202, 4
          %s210 = int_to_ptr.vmem [resolvable:$true] %s209
          %215 = dma.hbm_to_vmem [thread:$0]  %s208, 256, %s210, %s199, 128, 128, 8
        $region36: #{tpu_custom_call.1} parent=31 // pred_fallthru
          _
      $region32: #{tpu_custom_call.1} parent=5 // pred_fallthru
        _
      %p216 = scmp.le.s32.totalorder 1, %s18
      %p217 = scmp.lt.s32.totalorder %s18, 3
      %p218 = pnand %p216, %p217
      %p219 = pneg %p218
      // Predicated region
      $region37: #{tpu_custom_call.1} parent=5 // pred_check
        _
      $region38: #{tpu_custom_call.1} parent=5 // pred_check_branch
        %221 = sbr.rel (%p218) target = $region40
      $region39: #{tpu_custom_call.1} parent=5 // pred_region
        %s222 = ssub.s32 %s18, 1
        %s223 = sand.u32 %s31, 1
        %s224 = scalar_lea.sflag [#allocation3], %s223
        %s225 = sand.u32 %s31, 1
        %s226 = smul.addr %s225, 16
        %s227 = scalar_lea.vmem [#allocation2], %s226
        // Predicated region
        $region41: #{tpu_custom_call.1} parent=39 // pred_check
          %p228 = pneg %p44
        $region42: #{tpu_custom_call.1} parent=39 // pred_check_branch
          %230 = sbr.rel (%p228) target = $region44
        $region43: #{tpu_custom_call.1} parent=39 // pred_region
          %231 = dma.done %s224, 256
        $region44: #{tpu_custom_call.1} parent=39 // pred_fallthru
          _
        // Predicated region
        $region45: #{tpu_custom_call.1} parent=39 // pred_check
          %p232 = pneg %p65
        $region46: #{tpu_custom_call.1} parent=39 // pred_check_branch
          %234 = sbr.rel (%p232) target = $region48
        $region47: #{tpu_custom_call.1} parent=39 // pred_region
          %235 = dma.done [#allocation6], 6144
        $region48: #{tpu_custom_call.1} parent=39 // pred_fallthru
          _
        %s236 = sand.u32 %s31, 1
        %s237 = scalar_lea.sflag [#allocation3], %s236
        %s238 = sand.u32 %s31, 1
        %s239 = smul.addr %s238, 16
        %s240 = scalar_lea.vmem [#allocation2], %s239
        %p241 = pneg %p44
        %p242 = pneg %p41
        %p243 = pneg %p65
        %p244 = pneg %p62
        %p245 = pneg %p86
        %p246 = pneg %p83
        %p247 = pneg %p107
        %p248 = pneg %p104
        %p249 = pneg %p128
        %p250 = pneg %p125
        %p251 = pneg %p154
        %p252 = pneg %p151
        %s253 = sand.u32 %s141, 1
        %s254 = scalar_lea.sflag [#allocation4], %s253
        %s255 = sand.u32 %s141, 1
        %s256 = smul.addr %s255, 16
        %s257 = scalar_lea.vmem [#allocation7], %s256
        %s258 = smul.u32 2, %s23
        %s259 = smul.u32 2, %s23
        %v260 = vld [vmem:[%s227] sm:$0xff]
        %v261 = vld [vmem:[%s227 + $0x8] sm:$0xff]
        %v262 = vld [vmem:[#allocation5] sm:$0xff]
        %v263 = vld [vmem:[#allocation5 + $0x8] sm:$0xff]
        %v264 = vld [vmem:[#allocation5 + $0x10] sm:$0xff]
        %v265 = vld [vmem:[#allocation5 + $0x18] sm:$0xff]
        %v266 = vld [vmem:[#allocation5 + $0x20] sm:$0xff]
        %v267 = vld [vmem:[#allocation5 + $0x28] sm:$0xff]
        %v268 = vld [vmem:[#allocation5 + $0x30] sm:$0xff]
        %v269 = vld [vmem:[#allocation5 + $0x38] sm:$0xff]
        %v270 = vld [vmem:[#allocation5 + $0x40] sm:$0xff]
        %v271 = vld [vmem:[#allocation5 + $0x48] sm:$0xff]
        %v272 = vld [vmem:[#allocation5 + $0x50] sm:$0xff]
        %v273 = vld [vmem:[#allocation5 + $0x58] sm:$0xff]
        %v274 = vld [vmem:[#allocation5 + $0x60] sm:$0xff]
        %v275 = vld [vmem:[#allocation5 + $0x68] sm:$0xff]
        %v276 = vld [vmem:[#allocation5 + $0x70] sm:$0xff]
        %v277 = vld [vmem:[#allocation5 + $0x78] sm:$0xff]
        %v278 = vld [vmem:[#allocation5 + $0x80] sm:$0xff]
        %v279 = vld [vmem:[#allocation5 + $0x88] sm:$0xff]
        %v280 = vld [vmem:[#allocation5 + $0x90] sm:$0xff]
        %v281 = vld [vmem:[#allocation5 + $0x98] sm:$0xff]
        %v282 = vld [vmem:[#allocation5 + $0xa0] sm:$0xff]
        %v283 = vld [vmem:[#allocation5 + $0xa8] sm:$0xff]
        %v284 = vld [vmem:[#allocation5 + $0xb0] sm:$0xff]
        %v285 = vld [vmem:[#allocation5 + $0xb8] sm:$0xff]
        %v286 = vld [vmem:[#allocation5 + $0xc0] sm:$0xff]
        %v287 = vld [vmem:[#allocation5 + $0xc8] sm:$0xff]
        %v288 = vld [vmem:[#allocation5 + $0xd0] sm:$0xff]
        %v289 = vld [vmem:[#allocation5 + $0xd8] sm:$0xff]
        %v290 = vld [vmem:[#allocation5 + $0xe0] sm:$0xff]
        %v291 = vld [vmem:[#allocation5 + $0xe8] sm:$0xff]
        %v292 = vld [vmem:[#allocation5 + $0xf0] sm:$0xff]
        %v293 = vld [vmem:[#allocation5 + $0xf8] sm:$0xff]
        %v294 = vld [vmem:[#allocation5 + $0x100] sm:$0xff]
        %v295 = vld [vmem:[#allocation5 + $0x108] sm:$0xff]
        %v296 = vld [vmem:[#allocation5 + $0x110] sm:$0xff]
        %v297 = vld [vmem:[#allocation5 + $0x118] sm:$0xff]
        %v298 = vld [vmem:[#allocation5 + $0x120] sm:$0xff]
        %v299 = vld [vmem:[#allocation5 + $0x128] sm:$0xff]
        %v300 = vld [vmem:[#allocation5 + $0x130] sm:$0xff]
        %v301 = vld [vmem:[#allocation5 + $0x138] sm:$0xff]
        %v302 = vld [vmem:[#allocation5 + $0x140] sm:$0xff]
        %v303 = vld [vmem:[#allocation5 + $0x148] sm:$0xff]
        %v304 = vld [vmem:[#allocation5 + $0x150] sm:$0xff]
        %v305 = vld [vmem:[#allocation5 + $0x158] sm:$0xff]
        %v306 = vld [vmem:[#allocation5 + $0x160] sm:$0xff]
        %v307 = vld [vmem:[#allocation5 + $0x168] sm:$0xff]
        %v308 = vld [vmem:[#allocation5 + $0x170] sm:$0xff]
        %v309 = vld [vmem:[#allocation5 + $0x178] sm:$0xff]
        %v310 = vld [vmem:[%s2] sm:$0x7]
        %v312 = vlaneseq
        %v313 = vshrl.u32 %v312, 7
        %v314 = vsub.s32 0, %v313
        %v315 = vrot.slane %v310, %v314
        %v316 = vlaneseq
        %v317 = vshrl.u32 %v316, 7
        %v318 = vsub.s32 1, %v317
        %v319 = vrot.slane %v310, %v318
        %v320 = vlaneseq
        %v321 = vshrl.u32 %v320, 7
        %v322 = vsub.s32 2, %v321
        %v323 = vrot.slane %v310, %v322
        %327 = vmatprep.subr.mxu0 %v308
        %328 = vmatpush1.msra.mxu0 %v307
        %329 = vmatprep.subr.mxu0 %v305
        %330 = vmatpush1.msra.mxu0 %v304
        %331 = vmatprep.subr.mxu0 %v302
        %332 = vmatpush1.msra.mxu0 %v301
        %333 = vmatprep.subr.mxu0 %v299
        %334 = vmatpush1.msra.mxu0 %v298
        %335 = vmatprep.subr.mxu0 %v296
        %336 = vmatpush1.msra.mxu0 %v295
        %337 = vmatprep.subr.mxu0 %v293
        %338 = vmatpush1.msra.mxu0 %v292
        %339 = vmatprep.subr.mxu0 %v290
        %340 = vmatpush1.msra.mxu0 %v289
        %341 = vmatprep.subr.mxu0 %v287
        %342 = vmatpush1.msra.mxu0 %v286
        %343 = vmatprep.subr.mxu0 %v284
        %344 = vmatpush1.msra.mxu0 %v283
        %345 = vmatprep.subr.mxu0 %v281
        %346 = vmatpush1.msra.mxu0 %v280
        %347 = vmatprep.subr.mxu0 %v278
        %348 = vmatpush1.msra.mxu0 %v277
        %349 = vmatprep.subr.mxu0 %v275
        %350 = vmatpush1.msra.mxu0 %v274
        %351 = vmatprep.subr.mxu0 %v272
        %352 = vmatpush1.msra.mxu0 %v271
        %353 = vmatprep.subr.mxu0 %v269
        %354 = vmatpush1.msra.mxu0 %v268
        %355 = vmatprep.subr.mxu0 %v266
        %356 = vmatpush1.msra.mxu0 %v265
        %357 = vmatprep.subr.mxu0 %v263
        %358 = vmatpush1.msra.mxu0 %v262
        %359 = vmatprep.subr.mxu0 0.0
        %360 = vmatpush2.msra.mxu0 0.0
        %361 = vmatprep.subr.mxu0 0.0
        %362 = vmatpush2.msra.mxu0 0.0
        %363 = vmatprep.subr.mxu0 0.0
        %364 = vmatpush2.msra.mxu0 0.0
        %365 = vmatprep.subr.mxu0 0.0
        %366 = vmatpush2.msra.mxu0 0.0
        %367 = vmatprep.subr.mxu0 0.0
        %368 = vmatpush2.msra.mxu0 0.0
        %369 = vmatprep.subr.mxu0 0.0
        %370 = vmatpush2.msra.mxu0 0.0
        %371 = vmatprep.subr.mxu0 0.0
        %372 = vmatpush2.msra.mxu0 0.0
        %373 = vmatprep.subr.mxu0 0.0
        %374 = vmatpush2.msra.mxu0 0.0
        %375 = vmatprep.subr.mxu0 0.0
        %376 = vmatpush2.msra.mxu0 0.0
        %377 = vmatprep.subr.mxu0 0.0
        %378 = vmatpush2.msra.mxu0 0.0
        %379 = vmatprep.subr.mxu0 0.0
        %380 = vmatpush2.msra.mxu0 0.0
        %381 = vmatprep.subr.mxu0 0.0
        %382 = vmatpush2.msra.mxu0 0.0
        %383 = vmatprep.subr.mxu0 0.0
        %384 = vmatpush2.msra.mxu0 0.0
        %385 = vmatprep.subr.mxu0 0.0
        %386 = vmatpush2.msra.mxu0 0.0
        %387 = vmatprep.subr.mxu0 0.0
        %388 = vmatpush2.msra.mxu0 0.0
        %389 = vmatprep.subr.mxu0 0.0
        %390 = vmatpush2.msra.mxu0 0.0
        %391 = vmatprep.mubr.f32.mxu0 0.0
        %392 = vmatmul.mubr.f32.gmra.mxu0 %v260
        %v393 = vpop.f32.mrf.mxu0
        %v394 = vadd.f32 %v315, %v393
        %v395 = vpop.f32.mrf.mxu0
        %v396 = vadd.f32 %v319, %v395
        %397 = vmatprep.mubr.f32.mxu0 0.0
        %398 = vmatmul.mubr.f32.gmra.mxu0 %v261
        %v399 = vpop.f32.mrf.mxu0
        %v400 = vadd.f32 %v315, %v399
        %v401 = vpop.f32.mrf.mxu0
        %v402 = vadd.f32 %v319, %v401
        %403 = vdwg.mxu0
        %404 = vmatprep.subr.mxu0 0.0
        %405 = vmatpush1.msra.mxu0 %v309
        %406 = vmatprep.subr.mxu0 0.0
        %407 = vmatpush1.msra.mxu0 %v306
        %408 = vmatprep.subr.mxu0 0.0
        %409 = vmatpush1.msra.mxu0 %v303
        %410 = vmatprep.subr.mxu0 0.0
        %411 = vmatpush1.msra.mxu0 %v300
        %412 = vmatprep.subr.mxu0 0.0
        %413 = vmatpush1.msra.mxu0 %v297
        %414 = vmatprep.subr.mxu0 0.0
        %415 = vmatpush1.msra.mxu0 %v294
        %416 = vmatprep.subr.mxu0 0.0
        %417 = vmatpush1.msra.mxu0 %v291
        %418 = vmatprep.subr.mxu0 0.0
        %419 = vmatpush1.msra.mxu0 %v288
        %420 = vmatprep.subr.mxu0 0.0
        %421 = vmatpush1.msra.mxu0 %v285
        %422 = vmatprep.subr.mxu0 0.0
        %423 = vmatpush1.msra.mxu0 %v282
        %424 = vmatprep.subr.mxu0 0.0
        %425 = vmatpush1.msra.mxu0 %v279
        %426 = vmatprep.subr.mxu0 0.0
        %427 = vmatpush1.msra.mxu0 %v276
        %428 = vmatprep.subr.mxu0 0.0
        %429 = vmatpush1.msra.mxu0 %v273
        %430 = vmatprep.subr.mxu0 0.0
        %431 = vmatpush1.msra.mxu0 %v270
        %432 = vmatprep.subr.mxu0 0.0
        %433 = vmatpush1.msra.mxu0 %v267
        %434 = vmatprep.subr.mxu0 0.0
        %435 = vmatpush1.msra.mxu0 %v264
        %436 = vmatprep.subr.mxu0 0.0
        %437 = vmatpush2.msra.mxu0 0.0
        %438 = vmatprep.subr.mxu0 0.0
        %439 = vmatpush2.msra.mxu0 0.0
        %440 = vmatprep.subr.mxu0 0.0
        %441 = vmatpush2.msra.mxu0 0.0
        %442 = vmatprep.subr.mxu0 0.0
        %443 = vmatpush2.msra.mxu0 0.0
        %444 = vmatprep.subr.mxu0 0.0
        %445 = vmatpush2.msra.mxu0 0.0
        %446 = vmatprep.subr.mxu0 0.0
        %447 = vmatpush2.msra.mxu0 0.0
        %448 = vmatprep.subr.mxu0 0.0
        %449 = vmatpush2.msra.mxu0 0.0
        %450 = vmatprep.subr.mxu0 0.0
        %451 = vmatpush2.msra.mxu0 0.0
        %452 = vmatprep.subr.mxu0 0.0
        %453 = vmatpush2.msra.mxu0 0.0
        %454 = vmatprep.subr.mxu0 0.0
        %455 = vmatpush2.msra.mxu0 0.0
        %456 = vmatprep.subr.mxu0 0.0
        %457 = vmatpush2.msra.mxu0 0.0
        %458 = vmatprep.subr.mxu0 0.0
        %459 = vmatpush2.msra.mxu0 0.0
        %460 = vmatprep.subr.mxu0 0.0
        %461 = vmatpush2.msra.mxu0 0.0
        %462 = vmatprep.subr.mxu0 0.0
        %463 = vmatpush2.msra.mxu0 0.0
        %464 = vmatprep.subr.mxu0 0.0
        %465 = vmatpush2.msra.mxu0 0.0
        %466 = vmatprep.subr.mxu0 0.0
        %467 = vmatpush2.msra.mxu0 0.0
        %468 = vmatprep.mubr.f32.mxu0 0.0
        %469 = vmatmul.mubr.f32.gmra.mxu0 %v260
        %v470 = vpop.f32.mrf.mxu0
        %v471 = vadd.f32 %v323, %v470
        %v472 = vpop.f32.mrf.mxu0
        %473 = vmatprep.mubr.f32.mxu0 0.0
        %474 = vmatmul.mubr.f32.gmra.mxu0 %v261
        %v475 = vpop.f32.mrf.mxu0
        %v476 = vadd.f32 %v323, %v475
        %v477 = vpop.f32.mrf.mxu0
        %478 = vdwg.mxu0
        %479 = vmatprep.subr.mxu0 0.0
        %480 = vmatpush1.xpose.msra.mxu0 0.0
        %481 = vmatprep.subr.mxu0 0.0
        %482 = vmatpush1.xpose.msra.mxu0 0.0
        %483 = vmatprep.subr.mxu0 0.0
        %484 = vmatpush1.xpose.msra.mxu0 0.0
        %485 = vmatprep.subr.mxu0 0.0
        %486 = vmatpush1.xpose.msra.mxu0 0.0
        %487 = vmatprep.subr.mxu0 0.0
        %488 = vmatpush1.xpose.msra.mxu0 0.0
        %489 = vmatprep.subr.mxu0 0.0
        %490 = vmatpush1.xpose.msra.mxu0 0.0
        %491 = vmatprep.subr.mxu0 0.0
        %492 = vmatpush1.xpose.msra.mxu0 0.0
        %493 = vmatprep.subr.mxu0 0.0
        %494 = vmatpush1.xpose.msra.mxu0 0.0
        %495 = vmatprep.subr.mxu0 0.0
        %496 = vmatpush1.xpose.msra.mxu0 0.0
        %497 = vmatprep.subr.mxu0 0.0
        %498 = vmatpush1.xpose.msra.mxu0 0.0
        %499 = vmatprep.subr.mxu0 0.0
        %500 = vmatpush1.xpose.msra.mxu0 0.0
        %501 = vmatprep.subr.mxu0 0.0
        %502 = vmatpush1.xpose.msra.mxu0 0.0
        %503 = vmatprep.subr.mxu0 0.0
        %504 = vmatpush1.xpose.msra.mxu0 0.0
        %505 = vmatprep.subr.mxu0 0.0
        %506 = vmatpush1.xpose.msra.mxu0 0.0
        %507 = vmatprep.subr.mxu0 0.0
        %508 = vmatpush1.xpose.msra.mxu0 0.0
        %509 = vmatprep.subr.mxu0 0.0
        %510 = vmatpush1.xpose.msra.mxu0 %v396
        %511 = vmatprep.subr.mxu0 0.0
        %512 = vmatpush2.xpose.msra.mxu0 0.0
        %513 = vmatprep.subr.mxu0 0.0
        %514 = vmatpush2.xpose.msra.mxu0 0.0
        %515 = vmatprep.subr.mxu0 0.0
        %516 = vmatpush2.xpose.msra.mxu0 0.0
        %517 = vmatprep.subr.mxu0 0.0
        %518 = vmatpush2.xpose.msra.mxu0 0.0
        %519 = vmatprep.subr.mxu0 0.0
        %520 = vmatpush2.xpose.msra.mxu0 0.0
        %521 = vmatprep.subr.mxu0 0.0
        %522 = vmatpush2.xpose.msra.mxu0 0.0
        %523 = vmatprep.subr.mxu0 0.0
        %524 = vmatpush2.xpose.msra.mxu0 0.0
        %525 = vmatprep.subr.mxu0 0.0
        %526 = vmatpush2.xpose.msra.mxu0 0.0
        %527 = vmatprep.subr.mxu0 0.0
        %528 = vmatpush2.xpose.msra.mxu0 0.0
        %529 = vmatprep.subr.mxu0 0.0
        %530 = vmatpush2.xpose.msra.mxu0 0.0
        %531 = vmatprep.subr.mxu0 0.0
        %532 = vmatpush2.xpose.msra.mxu0 0.0
        %533 = vmatprep.subr.mxu0 0.0
        %534 = vmatpush2.xpose.msra.mxu0 0.0
        %535 = vmatprep.subr.mxu0 0.0
        %536 = vmatpush2.xpose.msra.mxu0 0.0
        %537 = vmatprep.subr.mxu0 0.0
        %538 = vmatpush2.xpose.msra.mxu0 0.0
        %539 = vmatprep.subr.mxu0 0.0
        %540 = vmatpush2.xpose.msra.mxu0 0.0
        %541 = vmatprep.subr.mxu0 0.0
        %542 = vmatpush2.xpose.msra.mxu0 0.0
        %543 = vmatprep.mubr.f32.mxu0 0.0
        %544 = vmatmul.mubr.f32.gmra.mxu0 %v394
        %v545 = vpop.f32.mrf.mxu0
        %v546 = vadd.f32 0.0, %v545
        %v547 = vpop.f32.mrf.mxu0
        %548 = vdwg.mxu0
        %549 = vmatprep.subr.mxu0 0.0
        %550 = vmatpush1.xpose.msra.mxu0 0.0
        %551 = vmatprep.subr.mxu0 0.0
        %552 = vmatpush1.xpose.msra.mxu0 0.0
        %553 = vmatprep.subr.mxu0 0.0
        %554 = vmatpush1.xpose.msra.mxu0 0.0
        %555 = vmatprep.subr.mxu0 0.0
        %556 = vmatpush1.xpose.msra.mxu0 0.0
        %557 = vmatprep.subr.mxu0 0.0
        %558 = vmatpush1.xpose.msra.mxu0 0.0
        %559 = vmatprep.subr.mxu0 0.0
        %560 = vmatpush1.xpose.msra.mxu0 0.0
        %561 = vmatprep.subr.mxu0 0.0
        %562 = vmatpush1.xpose.msra.mxu0 0.0
        %563 = vmatprep.subr.mxu0 0.0
        %564 = vmatpush1.xpose.msra.mxu0 0.0
        %565 = vmatprep.subr.mxu0 0.0
        %566 = vmatpush1.xpose.msra.mxu0 0.0
        %567 = vmatprep.subr.mxu0 0.0
        %568 = vmatpush1.xpose.msra.mxu0 0.0
        %569 = vmatprep.subr.mxu0 0.0
        %570 = vmatpush1.xpose.msra.mxu0 0.0
        %571 = vmatprep.subr.mxu0 0.0
        %572 = vmatpush1.xpose.msra.mxu0 0.0
        %573 = vmatprep.subr.mxu0 0.0
        %574 = vmatpush1.xpose.msra.mxu0 0.0
        %575 = vmatprep.subr.mxu0 0.0
        %576 = vmatpush1.xpose.msra.mxu0 0.0
        %577 = vmatprep.subr.mxu0 0.0
        %578 = vmatpush1.xpose.msra.mxu0 0.0
        %579 = vmatprep.subr.mxu0 0.0
        %580 = vmatpush1.xpose.msra.mxu0 %v402
        %581 = vmatprep.subr.mxu0 0.0
        %582 = vmatpush2.xpose.msra.mxu0 0.0
        %583 = vmatprep.subr.mxu0 0.0
        %584 = vmatpush2.xpose.msra.mxu0 0.0
        %585 = vmatprep.subr.mxu0 0.0
        %586 = vmatpush2.xpose.msra.mxu0 0.0
        %587 = vmatprep.subr.mxu0 0.0
        %588 = vmatpush2.xpose.msra.mxu0 0.0
        %589 = vmatprep.subr.mxu0 0.0
        %590 = vmatpush2.xpose.msra.mxu0 0.0
        %591 = vmatprep.subr.mxu0 0.0
        %592 = vmatpush2.xpose.msra.mxu0 0.0
        %593 = vmatprep.subr.mxu0 0.0
        %594 = vmatpush2.xpose.msra.mxu0 0.0
        %595 = vmatprep.subr.mxu0 0.0
        %596 = vmatpush2.xpose.msra.mxu0 0.0
        %597 = vmatprep.subr.mxu0 0.0
        %598 = vmatpush2.xpose.msra.mxu0 0.0
        %599 = vmatprep.subr.mxu0 0.0
        %600 = vmatpush2.xpose.msra.mxu0 0.0
        %601 = vmatprep.subr.mxu0 0.0
        %602 = vmatpush2.xpose.msra.mxu0 0.0
        %603 = vmatprep.subr.mxu0 0.0
        %604 = vmatpush2.xpose.msra.mxu0 0.0
        %605 = vmatprep.subr.mxu0 0.0
        %606 = vmatpush2.xpose.msra.mxu0 0.0
        %607 = vmatprep.subr.mxu0 0.0
        %608 = vmatpush2.xpose.msra.mxu0 0.0
        %609 = vmatprep.subr.mxu0 0.0
        %610 = vmatpush2.xpose.msra.mxu0 0.0
        %611 = vmatprep.subr.mxu0 0.0
        %612 = vmatpush2.xpose.msra.mxu0 0.0
        %613 = vmatprep.mubr.f32.mxu0 0.0
        %614 = vmatmul.mubr.f32.gmra.mxu0 %v400
        %v615 = vpop.f32.mrf.mxu0
        %v616 = vadd.f32 0.0, %v615
        %v617 = vpop.f32.mrf.mxu0
        %618 = vdwg.mxu0
        %vm619 = vcmask 64512
        %v620 = vsel %vm619, %v546, -inf
        %621 = vmax.xlane.f32.xlu0 %v620
        %v622 = vpop.xlane.xlu0 %621
        %v623 = vsel %vm619, %v616, -inf
        %624 = vmax.xlane.f32.xlu0 %v623
        %v625 = vpop.xlane.xlu0 %624
        %v626 = vsub.f32 %v546, %v622
        %v627 = vsub.f32 %v616, %v625
        %v628 = vmul.f32 %v626, 1.442695
        %v629 = vpow.pop %v628
        %v630 = vmul.f32 %v627, 1.442695
        %v631 = vpow.pop %v630
        %v632 = vsel %vm619, %v629, 0.0
        %633 = vadd.xlane.f32.xlu0 %v632
        %v634 = vpop.xlane.xlu0 %633
        %v635 = vsel %vm619, %v631, 0.0
        %636 = vadd.xlane.f32.xlu0 %v635
        %v637 = vpop.xlane.xlu0 %636
        %v639 = vsel %vm619, %v629, 0
        %641 = vmatprep.subr.mxu0 0.0
        %642 = vmatpush1.msra.mxu0 0.0
        %643 = vmatprep.subr.mxu0 0.0
        %644 = vmatpush1.msra.mxu0 0.0
        %645 = vmatprep.subr.mxu0 0.0
        %646 = vmatpush1.msra.mxu0 0.0
        %647 = vmatprep.subr.mxu0 0.0
        %648 = vmatpush1.msra.mxu0 0.0
        %649 = vmatprep.subr.mxu0 0.0
        %650 = vmatpush1.msra.mxu0 0.0
        %651 = vmatprep.subr.mxu0 0.0
        %652 = vmatpush1.msra.mxu0 0.0
        %653 = vmatprep.subr.mxu0 0.0
        %654 = vmatpush1.msra.mxu0 0.0
        %655 = vmatprep.subr.mxu0 0.0
        %656 = vmatpush1.msra.mxu0 0.0
        %657 = vmatprep.subr.mxu0 0.0
        %658 = vmatpush1.msra.mxu0 0.0
        %659 = vmatprep.subr.mxu0 0.0
        %660 = vmatpush1.msra.mxu0 0.0
        %661 = vmatprep.subr.mxu0 0.0
        %662 = vmatpush1.msra.mxu0 0.0
        %663 = vmatprep.subr.mxu0 0.0
        %664 = vmatpush1.msra.mxu0 0.0
        %665 = vmatprep.subr.mxu0 0.0
        %666 = vmatpush1.msra.mxu0 0.0
        %667 = vmatprep.subr.mxu0 0.0
        %668 = vmatpush1.msra.mxu0 0.0
        %669 = vmatprep.subr.mxu0 0.0
        %670 = vmatpush1.msra.mxu0 0.0
        %671 = vmatprep.subr.mxu0 0.0
        %672 = vmatpush1.msra.mxu0 %v471
        %673 = vmatprep.subr.mxu0 0.0
        %674 = vmatpush2.msra.mxu0 0.0
        %675 = vmatprep.subr.mxu0 0.0
        %676 = vmatpush2.msra.mxu0 0.0
        %677 = vmatprep.subr.mxu0 0.0
        %678 = vmatpush2.msra.mxu0 0.0
        %679 = vmatprep.subr.mxu0 0.0
        %680 = vmatpush2.msra.mxu0 0.0
        %681 = vmatprep.subr.mxu0 0.0
        %682 = vmatpush2.msra.mxu0 0.0
        %683 = vmatprep.subr.mxu0 0.0
        %684 = vmatpush2.msra.mxu0 0.0
        %685 = vmatprep.subr.mxu0 0.0
        %686 = vmatpush2.msra.mxu0 0.0
        %687 = vmatprep.subr.mxu0 0.0
        %688 = vmatpush2.msra.mxu0 0.0
        %689 = vmatprep.subr.mxu0 0.0
        %690 = vmatpush2.msra.mxu0 0.0
        %691 = vmatprep.subr.mxu0 0.0
        %692 = vmatpush2.msra.mxu0 0.0
        %693 = vmatprep.subr.mxu0 0.0
        %694 = vmatpush2.msra.mxu0 0.0
        %695 = vmatprep.subr.mxu0 0.0
        %696 = vmatpush2.msra.mxu0 0.0
        %697 = vmatprep.subr.mxu0 0.0
        %698 = vmatpush2.msra.mxu0 0.0
        %699 = vmatprep.subr.mxu0 0.0
        %700 = vmatpush2.msra.mxu0 0.0
        %701 = vmatprep.subr.mxu0 0.0
        %702 = vmatpush2.msra.mxu0 0.0
        %703 = vmatprep.subr.mxu0 0.0
        %704 = vmatpush2.msra.mxu0 0.0
        %705 = vmatprep.mubr.f32.mxu0 0.0
        %706 = vmatmul.mubr.f32.gmra.mxu0 %v639
        %v707 = vpop.f32.mrf.mxu0
        %v708 = vadd.f32 0.0, %v707
        %v709 = vpop.f32.mrf.mxu0
        %710 = vdwg.mxu0
        %v712 = vsel %vm619, %v631, 0
        %714 = vmatprep.subr.mxu0 0.0
        %715 = vmatpush1.msra.mxu0 0.0
        %716 = vmatprep.subr.mxu0 0.0
        %717 = vmatpush1.msra.mxu0 0.0
        %718 = vmatprep.subr.mxu0 0.0
        %719 = vmatpush1.msra.mxu0 0.0
        %720 = vmatprep.subr.mxu0 0.0
        %721 = vmatpush1.msra.mxu0 0.0
        %722 = vmatprep.subr.mxu0 0.0
        %723 = vmatpush1.msra.mxu0 0.0
        %724 = vmatprep.subr.mxu0 0.0
        %725 = vmatpush1.msra.mxu0 0.0
        %726 = vmatprep.subr.mxu0 0.0
        %727 = vmatpush1.msra.mxu0 0.0
        %728 = vmatprep.subr.mxu0 0.0
        %729 = vmatpush1.msra.mxu0 0.0
        %730 = vmatprep.subr.mxu0 0.0
        %731 = vmatpush1.msra.mxu0 0.0
        %732 = vmatprep.subr.mxu0 0.0
        %733 = vmatpush1.msra.mxu0 0.0
        %734 = vmatprep.subr.mxu0 0.0
        %735 = vmatpush1.msra.mxu0 0.0
        %736 = vmatprep.subr.mxu0 0.0
        %737 = vmatpush1.msra.mxu0 0.0
        %738 = vmatprep.subr.mxu0 0.0
        %739 = vmatpush1.msra.mxu0 0.0
        %740 = vmatprep.subr.mxu0 0.0
        %741 = vmatpush1.msra.mxu0 0.0
        %742 = vmatprep.subr.mxu0 0.0
        %743 = vmatpush1.msra.mxu0 0.0
        %744 = vmatprep.subr.mxu0 0.0
        %745 = vmatpush1.msra.mxu0 %v476
        %746 = vmatprep.subr.mxu0 0.0
        %747 = vmatpush2.msra.mxu0 0.0
        %748 = vmatprep.subr.mxu0 0.0
        %749 = vmatpush2.msra.mxu0 0.0
        %750 = vmatprep.subr.mxu0 0.0
        %751 = vmatpush2.msra.mxu0 0.0
        %752 = vmatprep.subr.mxu0 0.0
        %753 = vmatpush2.msra.mxu0 0.0
        %754 = vmatprep.subr.mxu0 0.0
        %755 = vmatpush2.msra.mxu0 0.0
        %756 = vmatprep.subr.mxu0 0.0
        %757 = vmatpush2.msra.mxu0 0.0
        %758 = vmatprep.subr.mxu0 0.0
        %759 = vmatpush2.msra.mxu0 0.0
        %760 = vmatprep.subr.mxu0 0.0
        %761 = vmatpush2.msra.mxu0 0.0
        %762 = vmatprep.subr.mxu0 0.0
        %763 = vmatpush2.msra.mxu0 0.0
        %764 = vmatprep.subr.mxu0 0.0
        %765 = vmatpush2.msra.mxu0 0.0
        %766 = vmatprep.subr.mxu0 0.0
        %767 = vmatpush2.msra.mxu0 0.0
        %768 = vmatprep.subr.mxu0 0.0
        %769 = vmatpush2.msra.mxu0 0.0
        %770 = vmatprep.subr.mxu0 0.0
        %771 = vmatpush2.msra.mxu0 0.0
        %772 = vmatprep.subr.mxu0 0.0
        %773 = vmatpush2.msra.mxu0 0.0
        %774 = vmatprep.subr.mxu0 0.0
        %775 = vmatpush2.msra.mxu0 0.0
        %776 = vmatprep.subr.mxu0 0.0
        %777 = vmatpush2.msra.mxu0 0.0
        %778 = vmatprep.mubr.f32.mxu0 0.0
        %779 = vmatmul.mubr.f32.gmra.mxu0 %v712
        %v780 = vpop.f32.mrf.mxu0
        %v781 = vadd.f32 0.0, %v780
        %v782 = vpop.f32.mrf.mxu0
        %783 = vdwg.mxu0
        %v784 = vrcp.pop %v634
        %v785 = vrcp.pop %v637
        %v786 = vmul.f32 %v708, %v784
        %v787 = vmul.f32 %v781, %v785
        %v788 = vadd.f32 %v260, %v786
        %v789 = vadd.f32 %v261, %v787
        %790 = vadd.xlane.f32.xlu0 %v788
        %v791 = vpop.xlane.xlu0 %790
        %792 = vadd.xlane.f32.xlu0 %v789
        %v793 = vpop.xlane.xlu0 %792
        %v794 = vmul.f32 %v791, 0.03125
        %v795 = vmul.f32 %v793, 0.03125
        %v796 = vsub.f32 %v788, %v794
        %v797 = vsub.f32 %v789, %v795
        %v798 = vmul.f32 %v796, %v796
        %v799 = vmul.f32 %v797, %v797
        %800 = vadd.xlane.f32.xlu0 %v798
        %v801 = vpop.xlane.xlu0 %800
        %802 = vadd.xlane.f32.xlu0 %v799
        %v803 = vpop.xlane.xlu0 %802
        %v804 = vmul.f32 %v794, %v794
        %v805 = vmul.f32 %v795, %v795
        %v806 = vmul.f32 %v804, 96.0
        %v807 = vmul.f32 %v805, 96.0
        %v808 = vsub.f32 %v801, %v806
        %v809 = vsub.f32 %v803, %v807
        %v810 = vmul.f32 %v808, 0.03125
        %v811 = vmul.f32 %v809, 0.03125
        %v812 = vadd.f32 %v810, 1e-05
        %v813 = vadd.f32 %v811, 1e-05
        %v814 = vrsqrt.pop %v812
        %v815 = vrsqrt.pop %v813
        %v816 = vmul.f32 %v796, %v814
        %v817 = vmul.f32 %v797, %v815
        %v818 = vld [vmem:[%s3] sm:$0x1]
        %v820 = vlaneseq
        %v821 = vshrl.u32 %v820, 7
        %v822 = vsub.s32 0, %v821
        %v823 = vrot.slane %v818, %v822
        %v825 = vmul.f32 %v816, %v823
        %v826 = vmul.f32 %v817, %v823
        %v827 = vld [vmem:[%s4] sm:$0x1]
        %v829 = vlaneseq
        %v830 = vshrl.u32 %v829, 7
        %v831 = vsub.s32 0, %v830
        %v832 = vrot.slane %v827, %v831
        %v834 = vadd.f32 %v825, %v832
        %v835 = vadd.f32 %v826, %v832
        %836 = vst [vmem:[%s257] sm:$0xff] %v834
        %837 = vst [vmem:[%s257 + $0x8] sm:$0xff] %v835
        %s838 = sand.u32 %s141, 1
        %s839 = scalar_lea.sflag [#allocation4], %s838
        %s840 = sand.u32 %s141, 1
        %s841 = smul.addr %s840, 16
        %s842 = scalar_lea.vmem [#allocation7], %s841
        // Predicated region
        $region49: #{tpu_custom_call.1} parent=39 // pred_check
          %p843 = pneg %p151
        $region50: #{tpu_custom_call.1} parent=39 // pred_check_branch
          %845 = sbr.rel (%p843) target = $region52
        $region51: #{tpu_custom_call.1} parent=39 // pred_region
          %s846 = smul.u32 2, %s23
          %s848 = ssub.s32 256, 256
          %849 = vsyncadd %s839, %s848
          %s850 = smul.addr %s846, 128
          %s851 = scalar_lea.hbm %s5, %s850
          %s852 = sshll.u32 %s842, 4
          %s853 = int_to_ptr.vmem [resolvable:$true] %s852
          %858 = dma.vmem_to_hbm [thread:$0]  %s853, 256, %s851, %s839, 128, 128, 8
        $region52: #{tpu_custom_call.1} parent=39 // pred_fallthru
          _
      $region40: #{tpu_custom_call.1} parent=5 // pred_fallthru
        _
      %p859 = scmp.le.s32.totalorder 2, %s18
      // Predicated region
      $region53: #{tpu_custom_call.1} parent=5 // pred_check
        %p860 = pneg %p859
      $region54: #{tpu_custom_call.1} parent=5 // pred_check_branch
        %862 = sbr.rel (%p860) target = $region56
      $region55: #{tpu_custom_call.1} parent=5 // pred_region
        %s863 = ssub.s32 %s18, 2
        // Predicated region
        $region57: #{tpu_custom_call.1} parent=55 // pred_check
          %p864 = pneg %p157
        $region58: #{tpu_custom_call.1} parent=55 // pred_check_branch
          %866 = sbr.rel (%p864) target = $region60
        $region59: #{tpu_custom_call.1} parent=55 // pred_region
          %s867 = sand.u32 %s142, 1
          %s868 = scalar_lea.sflag [#allocation4], %s867
          %s869 = sand.u32 %s142, 1
          %s870 = smul.addr %s869, 16
          %s871 = scalar_lea.vmem [#allocation7], %s870
          %872 = dma.done %s868, 256
        $region60: #{tpu_custom_call.1} parent=55 // pred_fallthru
          _
      $region56: #{tpu_custom_call.1} parent=5 // pred_fallthru
        _
    $region6: #{tpu_custom_call.1} parent=1 // loop_footer
      %s22 = sadd.s32 1, %s18
    $region7: #{tpu_custom_call.1} parent=1 // loop_footer_branch
      %17 = sbr.rel target = $region3
    $region8: #{tpu_custom_call.1} parent=1 // loop_exit
      _
    %873 = vsyncpa [#allocation3], 1
    %s874 = scalar_lea.sflag [#allocation3], 1
    %875 = vsyncpa %s874, 1
    %876 = vsyncpa [#allocation6], 1
    %877 = vsyncpa [#allocation4], 1
    %s878 = scalar_lea.sflag [#allocation4], 1
    %879 = vsyncpa %s878, 1

// kernel: tpu_custom_call.1
$region0: #{tpu_custom_call.1}
  #allocation0 [shape = 'u32[]', space=smem, size = 0x4, offset = 0x4, fixed_abs, tag = 'smem constant byte address 0x4 - core index']
  #allocation1 [shape = 'u32[144,128]{1,0:T(1,128)}', space=vmem, size = 0x12000, scoped, tag = 'internal scratch']
  %s0 = inlined_call_operand.hbm [shape: f32[4,8,128], index: 0, kind: input, shape index: {}]
  %s1 = inlined_call_operand.hbm [shape: f32[128,384], index: 1, kind: input, shape index: {}]
  %s2 = inlined_call_operand.vmem [shape: f32[1,384], index: 2, kind: input, shape index: {}]
  %s3 = inlined_call_operand.vmem [shape: f32[1,128], index: 3, kind: input, shape index: {}]
  %s4 = inlined_call_operand.vmem [shape: f32[1,128], index: 4, kind: input, shape index: {}]
  %s5 = inlined_call_operand.hbm [shape: f32[4,8,128], index: 5, kind: output, shape index: {}]
  %s6 = sld [smem:[#allocation0]]
  $region61: #{tpu_custom_call.1} parent=0
    _
  %s8 = ssub.s32 1, %s6
  %s9 = scalar_select 0, %s8, %s6
  $region1: #{tpu_custom_call.1} parent=0
    #allocation2 [shape = 'u8[16384]{0}', space=vmem, size = 0x4000, scoped, tag = 'input window, operand 0']
    #allocation3 [shape = 's32[2]{0}', space=sflag, size = 0x8, scoped, tag = 'scoped memory for tpu_custom_call.1']
    #allocation4 [shape = 's32[2]{0}', space=sflag, size = 0x8, scoped, tag = 'scoped memory for tpu_custom_call.1']
    #allocation5 [shape = 'u8[196608]{0}', space=vmem, size = 0x30000, scoped, tag = 'input window, operand 1, single buffered']
    #allocation6 [shape = 's32[1]{0}', space=sflag, size = 0x4, scoped, tag = 'scoped memory for tpu_custom_call.1']
    #allocation7 [shape = 'u8[16384]{0}', space=vmem, size = 0x4000, scoped, tag = 'output window, operand 0']
    %10 = vsyncpa [#allocation3], 0
    %s11 = scalar_lea.sflag [#allocation3], 1
    %12 = vsyncpa %s11, 0
    %13 = vsyncpa [#allocation6], 0
    %14 = vsyncpa [#allocation4], 0
    %s15 = scalar_lea.sflag [#allocation4], 1
    %16 = vsyncpa %s15, 0
    loop: start=0, step=1, limit=4
    $region2: #{tpu_custom_call.1} parent=1 // loop_pre_header
      _
    $region3: #{tpu_custom_call.1} parent=1 // loop_header
      %s18 = sphi 0, %s22
      %p19 = scmp.ge.s32.totalorder %s18, 4
      %s28 = sphi 0, %s30
      %s31 = sphi 0, %s28
      %s32 = sphi 0, %s31
      %s48 = sphi 0, %s32
      %s52 = sphi 0, %s52
      %s54 = sphi 0, %s52
      %s55 = sphi 0, %s54
      %s69 = sphi 0, %s55
      %s73 = sphi 0, %s73
      %s75 = sphi 0, %s73
      %s76 = sphi 0, %s75
      %s90 = sphi 0, %s76
      %s94 = sphi 0, %s94
      %s96 = sphi 0, %s94
      %s97 = sphi 0, %s96
      %s111 = sphi 0, %s97
      %s115 = sphi 0, %s115
      %s117 = sphi 0, %s115
      %s118 = sphi 0, %s117
      %s132 = sphi 0, %s118
      %s138 = sphi 0, %s140
      %s141 = sphi 0, %s138
      %s142 = sphi 0, %s141
      %s158 = sphi 0, %s142
    $region4: #{tpu_custom_call.1} parent=1 // loop_header_branch
      %21 = sbr.rel (%p19) target = $region8
    $region5: #{tpu_custom_call.1} parent=1 // loop_body
      %s23 = ssub.s32 %s18, 1
      %s24 = ssub.s32 %s18, 2
      %s25 = sadd.s32 %s18, 1
      %s26 = ssub.s32 %s18, %s25
      %p27 = scmp.eq.s32.totalorder %s26, 0
      %s29 = sadd.s32 %s28, 1
      %s30 = scalar_select %p27, %s28, %s29
      %p33 = pneg %p27
      %p34 = scmp.eq.s32.totalorder %s18, 1
      %p35 = por %p33, %p34
      %p36 = scmp.ne.s32.totalorder %s28, %s31
      %p37 = scmp.eq.s32.totalorder %s18, 0
      %p38 = por %p36, %p37
      %p39 = scmp.ne.s32.totalorder %s28, %s31
      %p40 = scmp.eq.s32.totalorder %s23, 1
      %p41 = por %p39, %p40
      %p42 = scmp.ne.s32.totalorder %s31, %s32
      %p43 = scmp.eq.s32.totalorder %s23, 0
      %p44 = por %p42, %p43
      %p45 = scmp.ne.s32.totalorder %s31, %s32
      %p46 = scmp.eq.s32.totalorder %s24, 1
      %p47 = por %p45, %p46
      %p49 = scmp.ne.s32.totalorder %s32, %s48
      %p50 = scmp.eq.s32.totalorder %s24, 0
      %p51 = por %p49, %p50
      %s53 = sadd.s32 %s52, 1
      %p56 = scmp.eq.s32.totalorder %s18, 1
      %p57 = scmp.ne.s32.totalorder %s52, %s54
      %p58 = scmp.eq.s32.totalorder %s18, 0
      %p59 = por %p57, %p58
      %p60 = scmp.ne.s32.totalorder %s52, %s54
      %p61 = scmp.eq.s32.totalorder %s23, 1
      %p62 = por %p60, %p61
      %p63 = scmp.ne.s32.totalorder %s54, %s55
      %p64 = scmp.eq.s32.totalorder %s23, 0
      %p65 = por %p63, %p64
      %p66 = scmp.ne.s32.totalorder %s54, %s55
      %p67 = scmp.eq.s32.totalorder %s24, 1
      %p68 = por %p66, %p67
      %p70 = scmp.ne.s32.totalorder %s55, %s69
      %p71 = scmp.eq.s32.totalorder %s24, 0
      %p72 = por %p70, %p71
      %s74 = sadd.s32 %s73, 1
      %p77 = scmp.eq.s32.totalorder %s18, 1
      %p78 = scmp.ne.s32.totalorder %s73, %s75
      %p79 = scmp.eq.s32.totalorder %s18, 0
      %p80 = por %p78, %p79
      %p81 = scmp.ne.s32.totalorder %s73, %s75
      %p82 = scmp.eq.s32.totalorder %s23, 1
      %p83 = por %p81, %p82
      %p84 = scmp.ne.s32.totalorder %s75, %s76
      %p85 = scmp.eq.s32.totalorder %s23, 0
      %p86 = por %p84, %p85
      %p87 = scmp.ne.s32.totalorder %s75, %s76
      %p88 = scmp.eq.s32.totalorder %s24, 1
      %p89 = por %p87, %p88
      %p91 = scmp.ne.s32.totalorder %s76, %s90
      %p92 = scmp.eq.s32.totalorder %s24, 0
      %p93 = por %p91, %p92
      %s95 = sadd.s32 %s94, 1
      %p98 = scmp.eq.s32.totalorder %s18, 1
      %p99 = scmp.ne.s32.totalorder %s94, %s96
      %p100 = scmp.eq.s32.totalorder %s18, 0
      %p101 = por %p99, %p100
      %p102 = scmp.ne.s32.totalorder %s94, %s96
      %p103 = scmp.eq.s32.totalorder %s23, 1
      %p104 = por %p102, %p103
      %p105 = scmp.ne.s32.totalorder %s96, %s97
      %p106 = scmp.eq.s32.totalorder %s23, 0
      %p107 = por %p105, %p106
      %p108 = scmp.ne.s32.totalorder %s96, %s97
      %p109 = scmp.eq.s32.totalorder %s24, 1
      %p110 = por %p108, %p109
      %p112 = scmp.ne.s32.totalorder %s97, %s111
      %p113 = scmp.eq.s32.totalorder %s24, 0
      %p114 = por %p112, %p113
      %s116 = sadd.s32 %s115, 1
      %p119 = scmp.eq.s32.totalorder %s18, 1
      %p120 = scmp.ne.s32.totalorder %s115, %s117
      %p121 = scmp.eq.s32.totalorder %s18, 0
      %p122 = por %p120, %p121
      %p123 = scmp.ne.s32.totalorder %s115, %s117
      %p124 = scmp.eq.s32.totalorder %s23, 1
      %p125 = por %p123, %p124
      %p126 = scmp.ne.s32.totalorder %s117, %s118
      %p127 = scmp.eq.s32.totalorder %s23, 0
      %p128 = por %p126, %p127
      %p129 = scmp.ne.s32.totalorder %s117, %s118
      %p130 = scmp.eq.s32.totalorder %s24, 1
      %p131 = por %p129, %p130
      %p133 = scmp.ne.s32.totalorder %s118, %s132
      %p134 = scmp.eq.s32.totalorder %s24, 0
      %p135 = por %p133, %p134
      %s136 = ssub.s32 %s18, %s25
      %p137 = scmp.eq.s32.totalorder %s136, 0
      %s139 = sadd.s32 %s138, 1
      %s140 = scalar_select %p137, %s138, %s139
      %p143 = pneg %p137
      %p144 = scmp.eq.s32.totalorder %s18, 1
      %p145 = por %p143, %p144
      %p146 = scmp.ne.s32.totalorder %s138, %s141
      %p147 = scmp.eq.s32.totalorder %s18, 0
      %p148 = por %p146, %p147
      %p149 = scmp.ne.s32.totalorder %s138, %s141
      %p150 = scmp.eq.s32.totalorder %s23, 1
      %p151 = por %p149, %p150
      %p152 = scmp.ne.s32.totalorder %s141, %s142
      %p153 = scmp.eq.s32.totalorder %s23, 0
      %p154 = por %p152, %p153
      %p155 = scmp.ne.s32.totalorder %s141, %s142
      %p156 = scmp.eq.s32.totalorder %s24, 1
      %p157 = por %p155, %p156
      %p159 = scmp.ne.s32.totalorder %s142, %s158
      %p160 = scmp.eq.s32.totalorder %s24, 0
      %p161 = por %p159, %p160
      %p162 = scmp.le.s32.totalorder 1, %s18
      %p163 = scmp.lt.s32.totalorder %s18, 3
      %p164 = pnand %p162, %p163
      %p165 = pneg %p164
      // Predicated region
      $region9: #{tpu_custom_call.1} parent=5 // pred_check
        _
      $region10: #{tpu_custom_call.1} parent=5 // pred_check_branch
        %167 = sbr.rel (%p164) target = $region12
      $region11: #{tpu_custom_call.1} parent=5 // pred_region
        %s168 = ssub.s32 %s18, 1
        // Predicated region
        $region13: #{tpu_custom_call.1} parent=11 // pred_check
          %p169 = pneg %p65
        $region14: #{tpu_custom_call.1} parent=11 // pred_check_branch
          %171 = sbr.rel (%p169) target = $region16
        $region15: #{tpu_custom_call.1} parent=11 // pred_region
          %s173 = ssub.s32 6144, 6144
          %174 = vsyncadd [#allocation6], %s173
          %s175 = sshll.u32 [#allocation5], 4
          %s176 = int_to_ptr.vmem [resolvable:$true] %s175
          %181 = dma.hbm_to_vmem [thread:$0]  %s1, 6144, %s176, [#allocation6], 384, 384, 24
        $region16: #{tpu_custom_call.1} parent=11 // pred_fallthru
          _
        // Predicated region
        $region17: #{tpu_custom_call.1} parent=11 // pred_check
          %p182 = pneg %p86
        $region18: #{tpu_custom_call.1} parent=11 // pred_check_branch
          %184 = sbr.rel (%p182) target = $region20
        $region19: #{tpu_custom_call.1} parent=11 // pred_region
          _
        $region20: #{tpu_custom_call.1} parent=11 // pred_fallthru
          _
        // Predicated region
        $region21: #{tpu_custom_call.1} parent=11 // pred_check
          %p185 = pneg %p107
        $region22: #{tpu_custom_call.1} parent=11 // pred_check_branch
          %187 = sbr.rel (%p185) target = $region24
        $region23: #{tpu_custom_call.1} parent=11 // pred_region
          _
        $region24: #{tpu_custom_call.1} parent=11 // pred_fallthru
          _
        // Predicated region
        $region25: #{tpu_custom_call.1} parent=11 // pred_check
          %p188 = pneg %p128
        $region26: #{tpu_custom_call.1} parent=11 // pred_check_branch
          %190 = sbr.rel (%p188) target = $region28
        $region27: #{tpu_custom_call.1} parent=11 // pred_region
          _
        $region28: #{tpu_custom_call.1} parent=11 // pred_fallthru
          _
      $region12: #{tpu_custom_call.1} parent=5 // pred_fallthru
        _
      %p191 = scmp.lt.s32.totalorder %s18, 2
      // Predicated region
      $region29: #{tpu_custom_call.1} parent=5 // pred_check
        %p192 = pneg %p191
      $region30: #{tpu_custom_call.1} parent=5 // pred_check_branch
        %194 = sbr.rel (%p192) target = $region32
      $region31: #{tpu_custom_call.1} parent=5 // pred_region
        // Predicated region
        $region33: #{tpu_custom_call.1} parent=31 // pred_check
          %p195 = pneg %p38
        $region34: #{tpu_custom_call.1} parent=31 // pred_check_branch
          %197 = sbr.rel (%p195) target = $region36
        $region35: #{tpu_custom_call.1} parent=31 // pred_region
          %s198 = sand.u32 %s28, 1
          %s199 = scalar_lea.sflag [#allocation3], %s198
          %s200 = sand.u32 %s28, 1
          %s201 = smul.addr %s200, 16
          %s202 = scalar_lea.vmem [#allocation2], %s201
          %s203 = smul.u32 2, %s18
          %s205 = ssub.s32 256, 256
          %206 = vsyncadd %s199, %s205
          %s207 = smul.addr %s203, 128
          %s208 = scalar_lea.hbm %s0, %s207
          %s209 = sshll.u32 %s202, 4
          %s210 = int_to_ptr.vmem [resolvable:$true] %s209
          %215 = dma.hbm_to_vmem [thread:$0]  %s208, 256, %s210, %s199, 128, 128, 8
        $region36: #{tpu_custom_call.1} parent=31 // pred_fallthru
          _
      $region32: #{tpu_custom_call.1} parent=5 // pred_fallthru
        _
      %p216 = scmp.le.s32.totalorder 1, %s18
      %p217 = scmp.lt.s32.totalorder %s18, 3
      %p218 = pnand %p216, %p217
      %p219 = pneg %p218
      // Predicated region
      $region37: #{tpu_custom_call.1} parent=5 // pred_check
        _
      $region38: #{tpu_custom_call.1} parent=5 // pred_check_branch
        %221 = sbr.rel (%p218) target = $region40
      $region39: #{tpu_custom_call.1} parent=5 // pred_region
        %s222 = ssub.s32 %s18, 1
        %s223 = sand.u32 %s31, 1
        %s224 = scalar_lea.sflag [#allocation3], %s223
        %s225 = sand.u32 %s31, 1
        %s226 = smul.addr %s225, 16
        %s227 = scalar_lea.vmem [#allocation2], %s226
        // Predicated region
        $region41: #{tpu_custom_call.1} parent=39 // pred_check
          %p228 = pneg %p44
        $region42: #{tpu_custom_call.1} parent=39 // pred_check_branch
          %230 = sbr.rel (%p228) target = $region44
        $region43: #{tpu_custom_call.1} parent=39 // pred_region
          %231 = dma.done %s224, 256
        $region44: #{tpu_custom_call.1} parent=39 // pred_fallthru
          _
        // Predicated region
        $region45: #{tpu_custom_call.1} parent=39 // pred_check
          %p232 = pneg %p65
        $region46: #{tpu_custom_call.1} parent=39 // pred_check_branch
          %234 = sbr.rel (%p232) target = $region48
        $region47: #{tpu_custom_call.1} parent=39 // pred_region
          %235 = dma.done [#allocation6], 6144
        $region48: #{tpu_custom_call.1} parent=39 // pred_fallthru
          _
        %s236 = sand.u32 %s31, 1
        %s237 = scalar_lea.sflag [#allocation3], %s236
        %s238 = sand.u32 %s31, 1
        %s239 = smul.addr %s238, 16
        %s240 = scalar_lea.vmem [#allocation2], %s239
        %p241 = pneg %p44
        %p242 = pneg %p41
        %p243 = pneg %p65
        %p244 = pneg %p62
        %p245 = pneg %p86
        %p246 = pneg %p83
        %p247 = pneg %p107
        %p248 = pneg %p104
        %p249 = pneg %p128
        %p250 = pneg %p125
        %p251 = pneg %p154
        %p252 = pneg %p151
        %s253 = sand.u32 %s141, 1
        %s254 = scalar_lea.sflag [#allocation4], %s253
        %s255 = sand.u32 %s141, 1
        %s256 = smul.addr %s255, 16
        %s257 = scalar_lea.vmem [#allocation7], %s256
        %s258 = smul.u32 2, %s23
        %s259 = smul.u32 2, %s23
        %v260 = vld [vmem:[%s227] sm:$0xff]
        %v261 = vld [vmem:[%s227 + $0x8] sm:$0xff]
        %v262 = vld [vmem:[#allocation5] sm:$0xff]
        %v263 = vld [vmem:[#allocation5 + $0x8] sm:$0xff]
        %v264 = vld [vmem:[#allocation5 + $0x10] sm:$0xff]
        %v265 = vld [vmem:[#allocation5 + $0x18] sm:$0xff]
        %v266 = vld [vmem:[#allocation5 + $0x20] sm:$0xff]
        %v267 = vld [vmem:[#allocation5 + $0x28] sm:$0xff]
        %v268 = vld [vmem:[#allocation5 + $0x30] sm:$0xff]
        %v269 = vld [vmem:[#allocation5 + $0x38] sm:$0xff]
        %v270 = vld [vmem:[#allocation5 + $0x40] sm:$0xff]
        %v271 = vld [vmem:[#allocation5 + $0x48] sm:$0xff]
        %v272 = vld [vmem:[#allocation5 + $0x50] sm:$0xff]
        %v273 = vld [vmem:[#allocation5 + $0x58] sm:$0xff]
        %v274 = vld [vmem:[#allocation5 + $0x60] sm:$0xff]
        %v275 = vld [vmem:[#allocation5 + $0x68] sm:$0xff]
        %v276 = vld [vmem:[#allocation5 + $0x70] sm:$0xff]
        %v277 = vld [vmem:[#allocation5 + $0x78] sm:$0xff]
        %v278 = vld [vmem:[#allocation5 + $0x80] sm:$0xff]
        %v279 = vld [vmem:[#allocation5 + $0x88] sm:$0xff]
        %v280 = vld [vmem:[#allocation5 + $0x90] sm:$0xff]
        %v281 = vld [vmem:[#allocation5 + $0x98] sm:$0xff]
        %v282 = vld [vmem:[#allocation5 + $0xa0] sm:$0xff]
        %v283 = vld [vmem:[#allocation5 + $0xa8] sm:$0xff]
        %v284 = vld [vmem:[#allocation5 + $0xb0] sm:$0xff]
        %v285 = vld [vmem:[#allocation5 + $0xb8] sm:$0xff]
        %v286 = vld [vmem:[#allocation5 + $0xc0] sm:$0xff]
        %v287 = vld [vmem:[#allocation5 + $0xc8] sm:$0xff]
        %v288 = vld [vmem:[#allocation5 + $0xd0] sm:$0xff]
        %v289 = vld [vmem:[#allocation5 + $0xd8] sm:$0xff]
        %v290 = vld [vmem:[#allocation5 + $0xe0] sm:$0xff]
        %v291 = vld [vmem:[#allocation5 + $0xe8] sm:$0xff]
        %v292 = vld [vmem:[#allocation5 + $0xf0] sm:$0xff]
        %v293 = vld [vmem:[#allocation5 + $0xf8] sm:$0xff]
        %v294 = vld [vmem:[#allocation5 + $0x100] sm:$0xff]
        %v295 = vld [vmem:[#allocation5 + $0x108] sm:$0xff]
        %v296 = vld [vmem:[#allocation5 + $0x110] sm:$0xff]
        %v297 = vld [vmem:[#allocation5 + $0x118] sm:$0xff]
        %v298 = vld [vmem:[#allocation5 + $0x120] sm:$0xff]
        %v299 = vld [vmem:[#allocation5 + $0x128] sm:$0xff]
        %v300 = vld [vmem:[#allocation5 + $0x130] sm:$0xff]
        %v301 = vld [vmem:[#allocation5 + $0x138] sm:$0xff]
        %v302 = vld [vmem:[#allocation5 + $0x140] sm:$0xff]
        %v303 = vld [vmem:[#allocation5 + $0x148] sm:$0xff]
        %v304 = vld [vmem:[#allocation5 + $0x150] sm:$0xff]
        %v305 = vld [vmem:[#allocation5 + $0x158] sm:$0xff]
        %v306 = vld [vmem:[#allocation5 + $0x160] sm:$0xff]
        %v307 = vld [vmem:[#allocation5 + $0x168] sm:$0xff]
        %v308 = vld [vmem:[#allocation5 + $0x170] sm:$0xff]
        %v309 = vld [vmem:[#allocation5 + $0x178] sm:$0xff]
        %v310 = vld [vmem:[%s2] sm:$0x7]
        %v312 = vlaneseq
        %v313 = vshrl.u32 %v312, 7
        %v314 = vsub.s32 0, %v313
        %v315 = vrot.slane %v310, %v314
        %v316 = vlaneseq
        %v317 = vshrl.u32 %v316, 7
        %v318 = vsub.s32 1, %v317
        %v319 = vrot.slane %v310, %v318
        %v320 = vlaneseq
        %v321 = vshrl.u32 %v320, 7
        %v322 = vsub.s32 2, %v321
        %v323 = vrot.slane %v310, %v322
        %327 = vmatprep.subr.mxu0 %v308
        %328 = vmatpush1.msra.mxu0 %v307
        %329 = vmatprep.subr.mxu0 %v305
        %330 = vmatpush1.msra.mxu0 %v304
        %331 = vmatprep.subr.mxu0 %v302
        %332 = vmatpush1.msra.mxu0 %v301
        %333 = vmatprep.subr.mxu0 %v299
        %334 = vmatpush1.msra.mxu0 %v298
        %335 = vmatprep.subr.mxu0 %v296
        %336 = vmatpush1.msra.mxu0 %v295
        %337 = vmatprep.subr.mxu0 %v293
        %338 = vmatpush1.msra.mxu0 %v292
        %339 = vmatprep.subr.mxu0 %v290
        %340 = vmatpush1.msra.mxu0 %v289
        %341 = vmatprep.subr.mxu0 %v287
        %342 = vmatpush1.msra.mxu0 %v286
        %343 = vmatprep.subr.mxu0 %v284
        %344 = vmatpush1.msra.mxu0 %v283
        %345 = vmatprep.subr.mxu0 %v281
        %346 = vmatpush1.msra.mxu0 %v280
        %347 = vmatprep.subr.mxu0 %v278
        %348 = vmatpush1.msra.mxu0 %v277
        %349 = vmatprep.subr.mxu0 %v275
        %350 = vmatpush1.msra.mxu0 %v274
        %351 = vmatprep.subr.mxu0 %v272
        %352 = vmatpush1.msra.mxu0 %v271
        %353 = vmatprep.subr.mxu0 %v269
        %354 = vmatpush1.msra.mxu0 %v268
        %355 = vmatprep.subr.mxu0 %v266
        %356 = vmatpush1.msra.mxu0 %v265
        %357 = vmatprep.subr.mxu0 %v263
        %358 = vmatpush1.msra.mxu0 %v262
        %359 = vmatprep.subr.mxu0 0.0
        %360 = vmatpush2.msra.mxu0 0.0
        %361 = vmatprep.subr.mxu0 0.0
        %362 = vmatpush2.msra.mxu0 0.0
        %363 = vmatprep.subr.mxu0 0.0
        %364 = vmatpush2.msra.mxu0 0.0
        %365 = vmatprep.subr.mxu0 0.0
        %366 = vmatpush2.msra.mxu0 0.0
        %367 = vmatprep.subr.mxu0 0.0
        %368 = vmatpush2.msra.mxu0 0.0
        %369 = vmatprep.subr.mxu0 0.0
        %370 = vmatpush2.msra.mxu0 0.0
        %371 = vmatprep.subr.mxu0 0.0
        %372 = vmatpush2.msra.mxu0 0.0
        %373 = vmatprep.subr.mxu0 0.0
        %374 = vmatpush2.msra.mxu0 0.0
        %375 = vmatprep.subr.mxu0 0.0
        %376 = vmatpush2.msra.mxu0 0.0
        %377 = vmatprep.subr.mxu0 0.0
        %378 = vmatpush2.msra.mxu0 0.0
        %379 = vmatprep.subr.mxu0 0.0
        %380 = vmatpush2.msra.mxu0 0.0
        %381 = vmatprep.subr.mxu0 0.0
        %382 = vmatpush2.msra.mxu0 0.0
        %383 = vmatprep.subr.mxu0 0.0
        %384 = vmatpush2.msra.mxu0 0.0
        %385 = vmatprep.subr.mxu0 0.0
        %386 = vmatpush2.msra.mxu0 0.0
        %387 = vmatprep.subr.mxu0 0.0
        %388 = vmatpush2.msra.mxu0 0.0
        %389 = vmatprep.subr.mxu0 0.0
        %390 = vmatpush2.msra.mxu0 0.0
        %391 = vmatprep.mubr.f32.mxu0 0.0
        %392 = vmatmul.mubr.f32.gmra.mxu0 %v260
        %v393 = vpop.f32.mrf.mxu0
        %v394 = vadd.f32 %v315, %v393
        %v395 = vpop.f32.mrf.mxu0
        %v396 = vadd.f32 %v319, %v395
        %397 = vmatprep.mubr.f32.mxu0 0.0
        %398 = vmatmul.mubr.f32.gmra.mxu0 %v261
        %v399 = vpop.f32.mrf.mxu0
        %v400 = vadd.f32 %v315, %v399
        %v401 = vpop.f32.mrf.mxu0
        %v402 = vadd.f32 %v319, %v401
        %403 = vdwg.mxu0
        %404 = vmatprep.subr.mxu0 0.0
        %405 = vmatpush1.msra.mxu0 %v309
        %406 = vmatprep.subr.mxu0 0.0
        %407 = vmatpush1.msra.mxu0 %v306
        %408 = vmatprep.subr.mxu0 0.0
        %409 = vmatpush1.msra.mxu0 %v303
        %410 = vmatprep.subr.mxu0 0.0
        %411 = vmatpush1.msra.mxu0 %v300
        %412 = vmatprep.subr.mxu0 0.0
        %413 = vmatpush1.msra.mxu0 %v297
        %414 = vmatprep.subr.mxu0 0.0
        %415 = vmatpush1.msra.mxu0 %v294
        %416 = vmatprep.subr.mxu0 0.0
        %417 = vmatpush1.msra.mxu0 %v291
        %418 = vmatprep.subr.mxu0 0.0
        %419 = vmatpush1.msra.mxu0 %v288
        %420 = vmatprep.subr.mxu0 0.0
        %421 = vmatpush1.msra.mxu0 %v285
        %422 = vmatprep.subr.mxu0 0.0
        %423 = vmatpush1.msra.mxu0 %v282
        %424 = vmatprep.subr.mxu0 0.0
        %425 = vmatpush1.msra.mxu0 %v279
        %426 = vmatprep.subr.mxu0 0.0
        %427 = vmatpush1.msra.mxu0 %v276
        %428 = vmatprep.subr.mxu0 0.0
        %429 = vmatpush1.msra.mxu0 %v273
        %430 = vmatprep.subr.mxu0 0.0
        %431 = vmatpush1.msra.mxu0 %v270
        %432 = vmatprep.subr.mxu0 0.0
        %433 = vmatpush1.msra.mxu0 %v267
        %434 = vmatprep.subr.mxu0 0.0
        %435 = vmatpush1.msra.mxu0 %v264
        %436 = vmatprep.subr.mxu0 0.0
        %437 = vmatpush2.msra.mxu0 0.0
        %438 = vmatprep.subr.mxu0 0.0
        %439 = vmatpush2.msra.mxu0 0.0
        %440 = vmatprep.subr.mxu0 0.0
        %441 = vmatpush2.msra.mxu0 0.0
        %442 = vmatprep.subr.mxu0 0.0
        %443 = vmatpush2.msra.mxu0 0.0
        %444 = vmatprep.subr.mxu0 0.0
        %445 = vmatpush2.msra.mxu0 0.0
        %446 = vmatprep.subr.mxu0 0.0
        %447 = vmatpush2.msra.mxu0 0.0
        %448 = vmatprep.subr.mxu0 0.0
        %449 = vmatpush2.msra.mxu0 0.0
        %450 = vmatprep.subr.mxu0 0.0
        %451 = vmatpush2.msra.mxu0 0.0
        %452 = vmatprep.subr.mxu0 0.0
        %453 = vmatpush2.msra.mxu0 0.0
        %454 = vmatprep.subr.mxu0 0.0
        %455 = vmatpush2.msra.mxu0 0.0
        %456 = vmatprep.subr.mxu0 0.0
        %457 = vmatpush2.msra.mxu0 0.0
        %458 = vmatprep.subr.mxu0 0.0
        %459 = vmatpush2.msra.mxu0 0.0
        %460 = vmatprep.subr.mxu0 0.0
        %461 = vmatpush2.msra.mxu0 0.0
        %462 = vmatprep.subr.mxu0 0.0
        %463 = vmatpush2.msra.mxu0 0.0
        %464 = vmatprep.subr.mxu0 0.0
        %465 = vmatpush2.msra.mxu0 0.0
        %466 = vmatprep.subr.mxu0 0.0
        %467 = vmatpush2.msra.mxu0 0.0
        %468 = vmatprep.mubr.f32.mxu0 0.0
        %469 = vmatmul.mubr.f32.gmra.mxu0 %v260
        %v470 = vpop.f32.mrf.mxu0
        %v471 = vadd.f32 %v323, %v470
        %v472 = vpop.f32.mrf.mxu0
        %473 = vmatprep.mubr.f32.mxu0 0.0
        %474 = vmatmul.mubr.f32.gmra.mxu0 %v261
        %v475 = vpop.f32.mrf.mxu0
        %v476 = vadd.f32 %v323, %v475
        %v477 = vpop.f32.mrf.mxu0
        %478 = vdwg.mxu0
        %479 = vmatprep.subr.mxu0 0.0
        %480 = vmatpush1.xpose.msra.mxu0 0.0
        %481 = vmatprep.subr.mxu0 0.0
        %482 = vmatpush1.xpose.msra.mxu0 0.0
        %483 = vmatprep.subr.mxu0 0.0
        %484 = vmatpush1.xpose.msra.mxu0 0.0
        %485 = vmatprep.subr.mxu0 0.0
        %486 = vmatpush1.xpose.msra.mxu0 0.0
        %487 = vmatprep.subr.mxu0 0.0
        %488 = vmatpush1.xpose.msra.mxu0 0.0
        %489 = vmatprep.subr.mxu0 0.0
        %490 = vmatpush1.xpose.msra.mxu0 0.0
        %491 = vmatprep.subr.mxu0 0.0
        %492 = vmatpush1.xpose.msra.mxu0 0.0
        %493 = vmatprep.subr.mxu0 0.0
        %494 = vmatpush1.xpose.msra.mxu0 0.0
        %495 = vmatprep.subr.mxu0 0.0
        %496 = vmatpush1.xpose.msra.mxu0 0.0
        %497 = vmatprep.subr.mxu0 0.0
        %498 = vmatpush1.xpose.msra.mxu0 0.0
        %499 = vmatprep.subr.mxu0 0.0
        %500 = vmatpush1.xpose.msra.mxu0 0.0
        %501 = vmatprep.subr.mxu0 0.0
        %502 = vmatpush1.xpose.msra.mxu0 0.0
        %503 = vmatprep.subr.mxu0 0.0
        %504 = vmatpush1.xpose.msra.mxu0 0.0
        %505 = vmatprep.subr.mxu0 0.0
        %506 = vmatpush1.xpose.msra.mxu0 0.0
        %507 = vmatprep.subr.mxu0 0.0
        %508 = vmatpush1.xpose.msra.mxu0 0.0
        %509 = vmatprep.subr.mxu0 0.0
        %510 = vmatpush1.xpose.msra.mxu0 %v396
        %511 = vmatprep.subr.mxu0 0.0
        %512 = vmatpush2.xpose.msra.mxu0 0.0
        %513 = vmatprep.subr.mxu0 0.0
        %514 = vmatpush2.xpose.msra.mxu0 0.0
        %515 = vmatprep.subr.mxu0 0.0
        %516 = vmatpush2.xpose.msra.mxu0 0.0
        %517 = vmatprep.subr.mxu0 0.0
        %518 = vmatpush2.xpose.msra.mxu0 0.0
        %519 = vmatprep.subr.mxu0 0.0
        %520 = vmatpush2.xpose.msra.mxu0 0.0
        %521 = vmatprep.subr.mxu0 0.0
        %522 = vmatpush2.xpose.msra.mxu0 0.0
        %523 = vmatprep.subr.mxu0 0.0
        %524 = vmatpush2.xpose.msra.mxu0 0.0
        %525 = vmatprep.subr.mxu0 0.0
        %526 = vmatpush2.xpose.msra.mxu0 0.0
        %527 = vmatprep.subr.mxu0 0.0
        %528 = vmatpush2.xpose.msra.mxu0 0.0
        %529 = vmatprep.subr.mxu0 0.0
        %530 = vmatpush2.xpose.msra.mxu0 0.0
        %531 = vmatprep.subr.mxu0 0.0
        %532 = vmatpush2.xpose.msra.mxu0 0.0
        %533 = vmatprep.subr.mxu0 0.0
        %534 = vmatpush2.xpose.msra.mxu0 0.0
        %535 = vmatprep.subr.mxu0 0.0
        %536 = vmatpush2.xpose.msra.mxu0 0.0
        %537 = vmatprep.subr.mxu0 0.0
        %538 = vmatpush2.xpose.msra.mxu0 0.0
        %539 = vmatprep.subr.mxu0 0.0
        %540 = vmatpush2.xpose.msra.mxu0 0.0
        %541 = vmatprep.subr.mxu0 0.0
        %542 = vmatpush2.xpose.msra.mxu0 0.0
        %543 = vmatprep.mubr.f32.mxu0 0.0
        %544 = vmatmul.mubr.f32.gmra.mxu0 %v394
        %v545 = vpop.f32.mrf.mxu0
        %v546 = vadd.f32 0.0, %v545
        %v547 = vpop.f32.mrf.mxu0
        %548 = vdwg.mxu0
        %549 = vmatprep.subr.mxu0 0.0
        %550 = vmatpush1.xpose.msra.mxu0 0.0
        %551 = vmatprep.subr.mxu0 0.0
        %552 = vmatpush1.xpose.msra.mxu0 0.0
        %553 = vmatprep.subr.mxu0 0.0
        %554 = vmatpush1.xpose.msra.mxu0 0.0
        %555 = vmatprep.subr.mxu0 0.0
        %556 = vmatpush1.xpose.msra.mxu0 0.0
        %557 = vmatprep.subr.mxu0 0.0
        %558 = vmatpush1.xpose.msra.mxu0 0.0
        %559 = vmatprep.subr.mxu0 0.0
        %560 = vmatpush1.xpose.msra.mxu0 0.0
        %561 = vmatprep.subr.mxu0 0.0
        %562 = vmatpush1.xpose.msra.mxu0 0.0
        %563 = vmatprep.subr.mxu0 0.0
        %564 = vmatpush1.xpose.msra.mxu0 0.0
        %565 = vmatprep.subr.mxu0 0.0
        %566 = vmatpush1.xpose.msra.mxu0 0.0
        %567 = vmatprep.subr.mxu0 0.0
        %568 = vmatpush1.xpose.msra.mxu0 0.0
        %569 = vmatprep.subr.mxu0 0.0
        %570 = vmatpush1.xpose.msra.mxu0 0.0
        %571 = vmatprep.subr.mxu0 0.0
        %572 = vmatpush1.xpose.msra.mxu0 0.0
        %573 = vmatprep.subr.mxu0 0.0
        %574 = vmatpush1.xpose.msra.mxu0 0.0
        %575 = vmatprep.subr.mxu0 0.0
        %576 = vmatpush1.xpose.msra.mxu0 0.0
        %577 = vmatprep.subr.mxu0 0.0
        %578 = vmatpush1.xpose.msra.mxu0 0.0
        %579 = vmatprep.subr.mxu0 0.0
        %580 = vmatpush1.xpose.msra.mxu0 %v402
        %581 = vmatprep.subr.mxu0 0.0
        %582 = vmatpush2.xpose.msra.mxu0 0.0
        %583 = vmatprep.subr.mxu0 0.0
        %584 = vmatpush2.xpose.msra.mxu0 0.0
        %585 = vmatprep.subr.mxu0 0.0
        %586 = vmatpush2.xpose.msra.mxu0 0.0
        %587 = vmatprep.subr.mxu0 0.0
        %588 = vmatpush2.xpose.msra.mxu0 0.0
        %589 = vmatprep.subr.mxu0 0.0
        %590 = vmatpush2.xpose.msra.mxu0 0.0
        %591 = vmatprep.subr.mxu0 0.0
        %592 = vmatpush2.xpose.msra.mxu0 0.0
        %593 = vmatprep.subr.mxu0 0.0
        %594 = vmatpush2.xpose.msra.mxu0 0.0
        %595 = vmatprep.subr.mxu0 0.0
        %596 = vmatpush2.xpose.msra.mxu0 0.0
        %597 = vmatprep.subr.mxu0 0.0
        %598 = vmatpush2.xpose.msra.mxu0 0.0
        %599 = vmatprep.subr.mxu0 0.0
        %600 = vmatpush2.xpose.msra.mxu0 0.0
        %601 = vmatprep.subr.mxu0 0.0
        %602 = vmatpush2.xpose.msra.mxu0 0.0
        %603 = vmatprep.subr.mxu0 0.0
        %604 = vmatpush2.xpose.msra.mxu0 0.0
        %605 = vmatprep.subr.mxu0 0.0
        %606 = vmatpush2.xpose.msra.mxu0 0.0
        %607 = vmatprep.subr.mxu0 0.0
        %608 = vmatpush2.xpose.msra.mxu0 0.0
        %609 = vmatprep.subr.mxu0 0.0
        %610 = vmatpush2.xpose.msra.mxu0 0.0
        %611 = vmatprep.subr.mxu0 0.0
        %612 = vmatpush2.xpose.msra.mxu0 0.0
        %613 = vmatprep.mubr.f32.mxu0 0.0
        %614 = vmatmul.mubr.f32.gmra.mxu0 %v400
        %v615 = vpop.f32.mrf.mxu0
        %v616 = vadd.f32 0.0, %v615
        %v617 = vpop.f32.mrf.mxu0
        %618 = vdwg.mxu0
        %vm619 = vcmask 64512
        %v620 = vsel %vm619, %v546, -inf
        %621 = vmax.xlane.f32.xlu0 %v620
        %v622 = vpop.xlane.xlu0 %621
        %v623 = vsel %vm619, %v616, -inf
        %624 = vmax.xlane.f32.xlu0 %v623
        %v625 = vpop.xlane.xlu0 %624
        %v626 = vsub.f32 %v546, %v622
        %v627 = vsub.f32 %v616, %v625
        %v628 = vmul.f32 %v626, 1.442695
        %v629 = vpow.pop %v628
        %v630 = vmul.f32 %v627, 1.442695
        %v631 = vpow.pop %v630
        %v632 = vsel %vm619, %v629, 0.0
        %633 = vadd.xlane.f32.xlu0 %v632
        %v634 = vpop.xlane.xlu0 %633
        %v635 = vsel %vm619, %v631, 0.0
        %636 = vadd.xlane.f32.xlu0 %v635
        %v637 = vpop.xlane.xlu0 %636
        %v639 = vsel %vm619, %v629, 0
        %641 = vmatprep.subr.mxu0 0.0
        %642 = vmatpush1.msra.mxu0 0.0
        %643 = vmatprep.subr.mxu0 0.0
        %644 = vmatpush1.msra.mxu0 0.0
        %645 = vmatprep.subr.mxu0 0.0
        %646 = vmatpush1.msra.mxu0 0.0
        %647 = vmatprep.subr.mxu0 0.0
        %648 = vmatpush1.msra.mxu0 0.0
        %649 = vmatprep.subr.mxu0 0.0
        %650 = vmatpush1.msra.mxu0 0.0
        %651 = vmatprep.subr.mxu0 0.0
        %652 = vmatpush1.msra.mxu0 0.0
        %653 = vmatprep.subr.mxu0 0.0
        %654 = vmatpush1.msra.mxu0 0.0
        %655 = vmatprep.subr.mxu0 0.0
        %656 = vmatpush1.msra.mxu0 0.0
        %657 = vmatprep.subr.mxu0 0.0
        %658 = vmatpush1.msra.mxu0 0.0
        %659 = vmatprep.subr.mxu0 0.0
        %660 = vmatpush1.msra.mxu0 0.0
        %661 = vmatprep.subr.mxu0 0.0
        %662 = vmatpush1.msra.mxu0 0.0
        %663 = vmatprep.subr.mxu0 0.0
        %664 = vmatpush1.msra.mxu0 0.0
        %665 = vmatprep.subr.mxu0 0.0
        %666 = vmatpush1.msra.mxu0 0.0
        %667 = vmatprep.subr.mxu0 0.0
        %668 = vmatpush1.msra.mxu0 0.0
        %669 = vmatprep.subr.mxu0 0.0
        %670 = vmatpush1.msra.mxu0 0.0
        %671 = vmatprep.subr.mxu0 0.0
        %672 = vmatpush1.msra.mxu0 %v471
        %673 = vmatprep.subr.mxu0 0.0
        %674 = vmatpush2.msra.mxu0 0.0
        %675 = vmatprep.subr.mxu0 0.0
        %676 = vmatpush2.msra.mxu0 0.0
        %677 = vmatprep.subr.mxu0 0.0
        %678 = vmatpush2.msra.mxu0 0.0
        %679 = vmatprep.subr.mxu0 0.0
        %680 = vmatpush2.msra.mxu0 0.0
        %681 = vmatprep.subr.mxu0 0.0
        %682 = vmatpush2.msra.mxu0 0.0
        %683 = vmatprep.subr.mxu0 0.0
        %684 = vmatpush2.msra.mxu0 0.0
        %685 = vmatprep.subr.mxu0 0.0
        %686 = vmatpush2.msra.mxu0 0.0
        %687 = vmatprep.subr.mxu0 0.0
        %688 = vmatpush2.msra.mxu0 0.0
        %689 = vmatprep.subr.mxu0 0.0
        %690 = vmatpush2.msra.mxu0 0.0
        %691 = vmatprep.subr.mxu0 0.0
        %692 = vmatpush2.msra.mxu0 0.0
        %693 = vmatprep.subr.mxu0 0.0
        %694 = vmatpush2.msra.mxu0 0.0
        %695 = vmatprep.subr.mxu0 0.0
        %696 = vmatpush2.msra.mxu0 0.0
        %697 = vmatprep.subr.mxu0 0.0
        %698 = vmatpush2.msra.mxu0 0.0
        %699 = vmatprep.subr.mxu0 0.0
        %700 = vmatpush2.msra.mxu0 0.0
        %701 = vmatprep.subr.mxu0 0.0
        %702 = vmatpush2.msra.mxu0 0.0
        %703 = vmatprep.subr.mxu0 0.0
        %704 = vmatpush2.msra.mxu0 0.0
        %705 = vmatprep.mubr.f32.mxu0 0.0
        %706 = vmatmul.mubr.f32.gmra.mxu0 %v639
        %v707 = vpop.f32.mrf.mxu0
        %v708 = vadd.f32 0.0, %v707
        %v709 = vpop.f32.mrf.mxu0
        %710 = vdwg.mxu0
        %v712 = vsel %vm619, %v631, 0
        %714 = vmatprep.subr.mxu0 0.0
        %715 = vmatpush1.msra.mxu0 0.0
        %716 = vmatprep.subr.mxu0 0.0
        %717 = vmatpush1.msra.mxu0 0.0
        %718 = vmatprep.subr.mxu0 0.0
        %719 = vmatpush1.msra.mxu0 0.0
        %720 = vmatprep.subr.mxu0 0.0
        %721 = vmatpush1.msra.mxu0 0.0
        %722 = vmatprep.subr.mxu0 0.0
        %723 = vmatpush1.msra.mxu0 0.0
        %724 = vmatprep.subr.mxu0 0.0
        %725 = vmatpush1.msra.mxu0 0.0
        %726 = vmatprep.subr.mxu0 0.0
        %727 = vmatpush1.msra.mxu0 0.0
        %728 = vmatprep.subr.mxu0 0.0
        %729 = vmatpush1.msra.mxu0 0.0
        %730 = vmatprep.subr.mxu0 0.0
        %731 = vmatpush1.msra.mxu0 0.0
        %732 = vmatprep.subr.mxu0 0.0
        %733 = vmatpush1.msra.mxu0 0.0
        %734 = vmatprep.subr.mxu0 0.0
        %735 = vmatpush1.msra.mxu0 0.0
        %736 = vmatprep.subr.mxu0 0.0
        %737 = vmatpush1.msra.mxu0 0.0
        %738 = vmatprep.subr.mxu0 0.0
        %739 = vmatpush1.msra.mxu0 0.0
        %740 = vmatprep.subr.mxu0 0.0
        %741 = vmatpush1.msra.mxu0 0.0
        %742 = vmatprep.subr.mxu0 0.0
        %743 = vmatpush1.msra.mxu0 0.0
        %744 = vmatprep.subr.mxu0 0.0
        %745 = vmatpush1.msra.mxu0 %v476
        %746 = vmatprep.subr.mxu0 0.0
        %747 = vmatpush2.msra.mxu0 0.0
        %748 = vmatprep.subr.mxu0 0.0
        %749 = vmatpush2.msra.mxu0 0.0
        %750 = vmatprep.subr.mxu0 0.0
        %751 = vmatpush2.msra.mxu0 0.0
        %752 = vmatprep.subr.mxu0 0.0
        %753 = vmatpush2.msra.mxu0 0.0
        %754 = vmatprep.subr.mxu0 0.0
        %755 = vmatpush2.msra.mxu0 0.0
        %756 = vmatprep.subr.mxu0 0.0
        %757 = vmatpush2.msra.mxu0 0.0
        %758 = vmatprep.subr.mxu0 0.0
        %759 = vmatpush2.msra.mxu0 0.0
        %760 = vmatprep.subr.mxu0 0.0
        %761 = vmatpush2.msra.mxu0 0.0
        %762 = vmatprep.subr.mxu0 0.0
        %763 = vmatpush2.msra.mxu0 0.0
        %764 = vmatprep.subr.mxu0 0.0
        %765 = vmatpush2.msra.mxu0 0.0
        %766 = vmatprep.subr.mxu0 0.0
        %767 = vmatpush2.msra.mxu0 0.0
        %768 = vmatprep.subr.mxu0 0.0
        %769 = vmatpush2.msra.mxu0 0.0
        %770 = vmatprep.subr.mxu0 0.0
        %771 = vmatpush2.msra.mxu0 0.0
        %772 = vmatprep.subr.mxu0 0.0
        %773 = vmatpush2.msra.mxu0 0.0
        %774 = vmatprep.subr.mxu0 0.0
        %775 = vmatpush2.msra.mxu0 0.0
        %776 = vmatprep.subr.mxu0 0.0
        %777 = vmatpush2.msra.mxu0 0.0
        %778 = vmatprep.mubr.f32.mxu0 0.0
        %779 = vmatmul.mubr.f32.gmra.mxu0 %v712
        %v780 = vpop.f32.mrf.mxu0
        %v781 = vadd.f32 0.0, %v780
        %v782 = vpop.f32.mrf.mxu0
        %783 = vdwg.mxu0
        %v784 = vrcp.pop %v634
        %v785 = vrcp.pop %v637
        %v786 = vmul.f32 %v708, %v784
        %v787 = vmul.f32 %v781, %v785
        %v788 = vadd.f32 %v260, %v786
        %v789 = vadd.f32 %v261, %v787
        %790 = vadd.xlane.f32.xlu0 %v788
        %v791 = vpop.xlane.xlu0 %790
        %792 = vadd.xlane.f32.xlu0 %v789
        %v793 = vpop.xlane.xlu0 %792
        %v794 = vmul.f32 %v791, 0.03125
        %v795 = vmul.f32 %v793, 0.03125
        %v796 = vsub.f32 %v788, %v794
        %v797 = vsub.f32 %v789, %v795
        %v798 = vmul.f32 %v796, %v796
        %v799 = vmul.f32 %v797, %v797
        %800 = vadd.xlane.f32.xlu0 %v798
        %v801 = vpop.xlane.xlu0 %800
        %802 = vadd.xlane.f32.xlu0 %v799
        %v803 = vpop.xlane.xlu0 %802
        %v804 = vmul.f32 %v794, %v794
        %v805 = vmul.f32 %v795, %v795
        %v806 = vmul.f32 %v804, 96.0
        %v807 = vmul.f32 %v805, 96.0
        %v808 = vsub.f32 %v801, %v806
        %v809 = vsub.f32 %v803, %v807
        %v810 = vmul.f32 %v808, 0.03125
        %v811 = vmul.f32 %v809, 0.03125
        %v812 = vadd.f32 %v810, 1e-05
        %v813 = vadd.f32 %v811, 1e-05
        %v814 = vrsqrt.pop %v812
        %v815 = vrsqrt.pop %v813
        %v816 = vmul.f32 %v796, %v814
        %v817 = vmul.f32 %v797, %v815
        %v818 = vld [vmem:[%s3] sm:$0x1]
        %v820 = vlaneseq
        %v821 = vshrl.u32 %v820, 7
        %v822 = vsub.s32 0, %v821
        %v823 = vrot.slane %v818, %v822
        %v825 = vmul.f32 %v816, %v823
        %v826 = vmul.f32 %v817, %v823
        %v827 = vld [vmem:[%s4] sm:$0x1]
        %v829 = vlaneseq
        %v830 = vshrl.u32 %v829, 7
        %v831 = vsub.s32 0, %v830
        %v832 = vrot.slane %v827, %v831
        %v834 = vadd.f32 %v825, %v832
        %v835 = vadd.f32 %v826, %v832
        %836 = vst [vmem:[%s257] sm:$0xff] %v834
        %837 = vst [vmem:[%s257 + $0x8] sm:$0xff] %v835
        %s838 = sand.u32 %s141, 1
        %s839 = scalar_lea.sflag [#allocation4], %s838
        %s840 = sand.u32 %s141, 1
        %s841 = smul.addr %s840, 16
        %s842 = scalar_lea.vmem [#allocation7], %s841
        // Predicated region
        $region49: #{tpu_custom_call.1} parent=39 // pred_check
          %p843 = pneg %p151
        $region50: #{tpu_custom_call.1} parent=39 // pred_check_branch
          %845 = sbr.rel (%p843) target = $region52
        $region51: #{tpu_custom_call.1} parent=39 // pred_region
          %s846 = smul.u32 2, %s23
          %s848 = ssub.s32 256, 256
          %849 = vsyncadd %s839, %s848
          %s850 = smul.addr %s846, 128
          %s851 = scalar_lea.hbm %s5, %s850
          %s852 = sshll.u32 %s842, 4
          %s853 = int_to_ptr.vmem [resolvable:$true] %s852
          %858 = dma.vmem_to_hbm [thread:$0]  %s853, 256, %s851, %s839, 128, 128, 8
        $region52: #{tpu_custom_call.1} parent=39 // pred_fallthru
          _
      $region40: #{tpu_custom_call.1} parent=5 // pred_fallthru
        _
      %p859 = scmp.le.s32.totalorder 2, %s18
      // Predicated region
      $region53: #{tpu_custom_call.1} parent=5 // pred_check
        %p860 = pneg %p859
      $region54: #{tpu_custom_call.1} parent=5 // pred_check_branch
        %862 = sbr.rel (%p860) target = $region56
      $region55: #{tpu_custom_call.1} parent=5 // pred_region
        %s863 = ssub.s32 %s18, 2
        // Predicated region
        $region57: #{tpu_custom_call.1} parent=55 // pred_check
          %p864 = pneg %p157
        $region58: #{tpu_custom_call.1} parent=55 // pred_check_branch
          %866 = sbr.rel (%p864) target = $region60
        $region59: #{tpu_custom_call.1} parent=55 // pred_region
          %s867 = sand.u32 %s142, 1
          %s868 = scalar_lea.sflag [#allocation4], %s867
          %s869 = sand.u32 %s142, 1
          %s870 = smul.addr %s869, 16
          %s871 = scalar_lea.vmem [#allocation7], %s870
          %872 = dma.done %s868, 256
        $region60: #{tpu_custom_call.1} parent=55 // pred_fallthru
          _
      $region56: #{tpu_custom_call.1} parent=5 // pred_fallthru
        _
    $region6: #{tpu_custom_call.1} parent=1 // loop_footer
      %s22 = sadd.s32 1, %s18
    $region7: #{tpu_custom_call.1} parent=1 // loop_footer_branch
      %17 = sbr.rel target = $region3
    $region8: #{tpu_custom_call.1} parent=1 // loop_exit
      _
    %873 = vsyncpa [#allocation3], 1
    %s874 = scalar_lea.sflag [#allocation3], 1
    %875 = vsyncpa %s874, 1
    %876 = vsyncpa [#allocation6], 1
    %877 = vsyncpa [#allocation4], 1
    %s878 = scalar_lea.sflag [#allocation4], 1
    %879 = vsyncpa %s878, 1

</llo_original>
